<compile_context>
chip_gen: v5e
topology: v5e:2x2
jax: 0.10.0
libtpu: 0.0.40
codegen_flags: <defaults>
</compile_context>

<pallas_src>
import functools
import math

import numpy as np
import jax
import jax.numpy as jnp
from jax.experimental import pallas as pl
from jax.experimental.pallas import tpu as pltpu

LANE = 128  # lane width: padded output columns / wm3 columns

# --- packing layout (host-side prepare_params <-> static kernel offsets) -----
# encoder weight slab `encw` (f32, shape (_RW2 + dim_ff, max(D, dim_ff))):
#   rows are sublane-aligned (multiples of 8) so in-kernel slices start at
#   aligned offsets and lane offset 0.
_RQ, _RK, _RV, _RO, _RW1, _RW2 = 0, 8, 16, 24, 32, 40
# vector slab `vec` (f32, shape (13, 128*D)): one parameter vector per row.
(_VBQ, _VBK, _VBV, _VBO,
 _VG1, _VBE1, _VG2, _VBE2,
 _VB1, _VB2, _VBM1, _VBM2, _VBM3) = range(13)


# ----------------------------- kernel -----------------------------------------

def _layernorm(t, gamma, beta, eps):
    mu = jnp.mean(t, axis=-1, keepdims=True)
    d = t - mu
    var = jnp.mean(d * d, axis=-1, keepdims=True)
    return d * jax.lax.rsqrt(var + eps) * gamma + beta


def encoder_classifier_kernel(
    x_ref, encw_ref, vec_ref,           # VMEM inputs
    wm1_hbm, wm2_hbm, wm3_hbm,          # classifier weights, left in HBM (ANY)
    cls_ref, attn_ref,                  # outputs (lane-dense, padded to 128)
    wm1_v, wm2_v, wm3_v, sem,           # VMEM scratch + DMA semaphores
):
    eps = 0.1                           # layer_norm_eps of the encoder layer
    f32 = jnp.float32

    # Kick off the classifier-weight DMAs immediately; they overlap with the
    # attention / FFN compute below and are only waited on before use (P4).
    cp1 = pltpu.make_async_copy(wm1_hbm, wm1_v, sem.at[0])
    cp2 = pltpu.make_async_copy(wm2_hbm, wm2_v, sem.at[1])
    cp3 = pltpu.make_async_copy(wm3_hbm, wm3_v, sem.at[2])
    cp1.start()
    cp2.start()
    cp3.start()

    x = x_ref[...]                      # (B, S, D)
    B, S, D = x.shape
    dff = encw_ref.shape[0] - _RW2
    xt = x.reshape(B * S, D)            # token-major view for all linears

    def lin(inp, w_row, w_rows, w_cols, b_row, b_cols):
        w = encw_ref[w_row:w_row + w_rows, 0:w_cols]
        b = vec_ref[b_row:b_row + 1, 0:b_cols]
        return jnp.dot(inp, w, preferred_element_type=f32) + b

    # --- attention projections (un-fused; 1/sqrt(D) pre-folded into Q) ---
    q = lin(xt, _RQ, D, D, _VBQ, D).reshape(B, S, D)
    k = lin(xt, _RK, D, D, _VBK, D).reshape(B, S, D)
    v = lin(xt, _RV, D, D, _VBV, D).reshape(B, S, D)

    # --- single-head self attention, batched over B ---
    scores = jnp.einsum('bqd,bkd->bqk', q, k, preferred_element_type=f32)
    scores = scores - jnp.max(scores, axis=-1, keepdims=True)
    e = jnp.exp(scores)
    attn = e * pl.reciprocal(jnp.sum(e, axis=-1, keepdims=True), approx=True)

    # lane-dense attention store: (B*S, S) @ (S, LANE) identity-selector
    # (selector generated in-kernel; MXU slot is otherwise idle here)
    rows = jax.lax.broadcasted_iota(jnp.int32, (S, LANE), 0)
    cols = jax.lax.broadcasted_iota(jnp.int32, (S, LANE), 1)
    eyepad = (rows == cols).astype(f32)
    attn_ref[...] = jnp.dot(attn.reshape(B * S, S), eyepad,
                            preferred_element_type=f32).reshape(B, S, LANE)

    ao = jnp.einsum('bqk,bkd->bqd', attn, v, preferred_element_type=f32)
    ao = lin(ao.reshape(B * S, D), _RO, D, D, _VBO, D)

    # --- residual + LayerNorm 1 ---
    h = _layernorm(xt + ao,
                   vec_ref[_VG1:_VG1 + 1, 0:D],
                   vec_ref[_VBE1:_VBE1 + 1, 0:D], eps)

    # --- feed-forward + residual + LayerNorm 2 ---
    ff = jnp.maximum(lin(h, _RW1, D, dff, _VB1, dff), 0.0)
    ff = lin(ff, _RW2, dff, D, _VB2, D)
    h2 = _layernorm(h + ff,
                    vec_ref[_VG2:_VG2 + 1, 0:D],
                    vec_ref[_VBE2:_VBE2 + 1, 0:D], eps)

    # --- mean over sequence dim, ReLU ---
    pooled = jnp.maximum(jnp.mean(h2.reshape(B, S, D), axis=1), 0.0)   # (B, D)

    # --- MLP classifier: bf16 weights straight into the MXU, f32 accumulate ---
    cp1.wait()
    cp2.wait()
    cp3.wait()
    H1 = wm1_v.shape[1]
    H2 = wm2_v.shape[1]

    # pad pooled to wm1's (zero-padded) 8-row contraction dim -> no odd slice
    pad = wm1_v.shape[0] - D
    pooled_p = jnp.concatenate(
        [pooled, jnp.zeros((B, pad), dtype=f32)], axis=1)

    m = jnp.dot(pooled_p.astype(jnp.bfloat16), wm1_v[...],
                preferred_element_type=f32)
    m = jnp.maximum(m + vec_ref[_VBM1:_VBM1 + 1, 0:H1], 0.0)
    m = jnp.dot(m.astype(jnp.bfloat16), wm2_v[...],
                preferred_element_type=f32)
    m = jnp.maximum(m + vec_ref[_VBM2:_VBM2 + 1, 0:H2], 0.0)
    out = jnp.dot(m.astype(jnp.bfloat16), wm3_v[...],
                  preferred_element_type=f32)
    cls_ref[...] = out + vec_ref[_VBM3:_VBM3 + 1, 0:LANE]


# ----------------------------- host-side packing -------------------------------

def prepare_params(p, *, D, dff, n_class):
    """One-time weight preparation: folding, packing into slabs, bf16 casting."""
    scale = 1.0 / math.sqrt(D)           # head_dim == D for a single head
    f = lambda a: np.asarray(a, np.float32)
    H1, H2 = 128 * D, 32 * D

    # encoder weight slab (sublane-aligned rows, lane offset 0 everywhere)
    encw = np.zeros((_RW2 + dff, max(D, dff)), np.float32)
    encw[_RQ:_RQ + D, :D] = f(p["wq"]) * scale
    encw[_RK:_RK + D, :D] = f(p["wk"])
    encw[_RV:_RV + D, :D] = f(p["wv"])
    encw[_RO:_RO + D, :D] = f(p["wo"])
    encw[_RW1:_RW1 + D, :dff] = f(p["w1"])
    encw[_RW2:_RW2 + dff, :D] = f(p["w2"])

    # vector slab: biases / layernorm params, one per row
    vec = np.zeros((13, H1), np.float32)
    vec[_VBQ, :D] = f(p["bq"]).reshape(-1) * scale
    vec[_VBK, :D] = f(p["bk"]).reshape(-1)
    vec[_VBV, :D] = f(p["bv"]).reshape(-1)
    vec[_VBO, :D] = f(p["bo"]).reshape(-1)
    vec[_VG1, :D] = f(p["g1"]).reshape(-1)
    vec[_VBE1, :D] = f(p["beta1"]).reshape(-1)
    vec[_VG2, :D] = f(p["g2"]).reshape(-1)
    vec[_VBE2, :D] = f(p["beta2"]).reshape(-1)
    vec[_VB1, :dff] = f(p["b1"]).reshape(-1)
    vec[_VB2, :D] = f(p["b2"]).reshape(-1)
    vec[_VBM1, :H1] = f(p["bm1"]).reshape(-1)
    vec[_VBM2, :H2] = f(p["bm2"]).reshape(-1)
    vec[_VBM3, :n_class] = f(p["bm3"]).reshape(-1)   # zero-padded to LANE

    # classifier weights: bf16, zero-padded to friendly shapes
    wm1p = np.zeros((8, H1), np.float32)
    wm1p[:D] = f(p["wm1"])
    wm3p = np.zeros((H2, LANE), np.float32)
    wm3p[:, :n_class] = f(p["wm3"])

    return {
        "encw": jnp.asarray(encw),
        "vec": jnp.asarray(vec),
        "wm1": jnp.asarray(wm1p, dtype=jnp.bfloat16),
        "wm2": jnp.asarray(f(p["wm2"]), dtype=jnp.bfloat16),
        "wm3": jnp.asarray(wm3p, dtype=jnp.bfloat16),
    }


# ----------------------------- wrapper ------------------------------------------

def transformer_mintomics(x, prepped, *, n_class):
    B, S, D = x.shape
    encw, vec, wm1, wm2, wm3 = (prepped[k] for k in
                                ("encw", "vec", "wm1", "wm2", "wm3"))
    H1, H2 = wm2.shape
    dff = encw.shape[0] - _RW2

    flops = 2 * (4 * B * S * D * D            # q/k/v/out projections
                 + 2 * B * S * S * D          # scores + attn @ v
                 + B * S * S * LANE           # attention lane-pad selector
                 + 2 * B * S * D * dff        # feed-forward
                 + B * (D * H1 + H1 * H2 + H2 * LANE))   # classifier
    bytes_accessed = (x.size * 4 + encw.size * 4 + vec.size * 4
                      + (wm1.size + wm2.size + wm3.size) * 2
                      + B * LANE * 4 + B * S * LANE * 4)
    cost = pl.CostEstimate(flops=int(flops), transcendentals=int(B * S * S),
                           bytes_accessed=int(bytes_accessed))

    cls_pad, attn_pad = pl.pallas_call(
        encoder_classifier_kernel,
        out_shape=(
            jax.ShapeDtypeStruct((B, LANE), jnp.float32),
            jax.ShapeDtypeStruct((B, S, LANE), jnp.float32),
        ),
        in_specs=[
            pl.BlockSpec(memory_space=pltpu.MemorySpace.VMEM),   # x
            pl.BlockSpec(memory_space=pltpu.MemorySpace.VMEM),   # encw slab
            pl.BlockSpec(memory_space=pltpu.MemorySpace.VMEM),   # vec slab
            pl.BlockSpec(memory_space=pl.ANY),                   # wm1 (HBM)
            pl.BlockSpec(memory_space=pl.ANY),                   # wm2 (HBM)
            pl.BlockSpec(memory_space=pl.ANY),                   # wm3 (HBM)
        ],
        out_specs=(
            pl.BlockSpec(memory_space=pltpu.MemorySpace.VMEM),
            pl.BlockSpec(memory_space=pltpu.MemorySpace.VMEM),
        ),
        scratch_shapes=[
            pltpu.VMEM(wm1.shape, jnp.bfloat16),
            pltpu.VMEM(wm2.shape, jnp.bfloat16),
            pltpu.VMEM(wm3.shape, jnp.bfloat16),
            pltpu.SemaphoreType.DMA((3,)),
        ],
        cost_estimate=cost,
    )(x, encw, vec, wm1, wm2, wm3)

    # strip the lane padding (wrapper-side slices)
    return cls_pad[:, :n_class], attn_pad[:, :, :S]


# ------------------------- pure-JAX reference ------------------------------------

def reference(x, p):
    eps = 0.1
    D = x.shape[-1]
    hp = jax.lax.Precision.HIGHEST
    mm = lambda a, b: jnp.matmul(a, b, precision=hp)

    q = mm(x, p["wq"]) + p["bq"]
    k = mm(x, p["wk"]) + p["bk"]
    v = mm(x, p["wv"]) + p["bv"]
    scores = mm(q / math.sqrt(D), jnp.swapaxes(k, -1, -2))
    attn = jax.nn.softmax(scores, axis=-1)
    ao = mm(mm(attn, v), p["wo"]) + p["bo"]

    def ln(t, g, b):
        mu = jnp.mean(t, axis=-1, keepdims=True)
        var = jnp.mean((t - mu) ** 2, axis=-1, keepdims=True)
        return (t - mu) / jnp.sqrt(var + eps) * g + b

    h = ln(x + ao, p["g1"], p["beta1"])
    ff = mm(jnp.maximum(mm(h, p["w1"]) + p["b1"], 0.0), p["w2"]) + p["b2"]
    h2 = ln(h + ff, p["g2"], p["beta2"])
    pooled = jnp.maximum(jnp.mean(h2, axis=1), 0.0)

    # classifier weights/activations are bf16 in the kernel (MXU bf16 x bf16,
    # f32 accumulate) -- emulate the same rounding here
    r = lambda t: t.astype(jnp.bfloat16).astype(jnp.float32)

    m = jnp.maximum(mm(r(pooled), r(p["wm1"])) + p["bm1"], 0.0)
    m = jnp.maximum(mm(r(m), r(p["wm2"])) + p["bm2"], 0.0)
    out = mm(r(m), r(p["wm3"])) + p["bm3"]
    return out, attn


# ----------------------------- main ------------------------------------------------

def init_params(key, D=7, dim_ff=32, n_class=1):
    ks = jax.random.split(key, 16)
    s = 0.2
    return {
        # attention in-projection (pre-transposed to (in, out)) and out-projection
        "wq": jax.random.normal(ks[0], (D, D), jnp.float32) * s,
        "bq": jax.random.normal(ks[1], (1, D), jnp.float32) * s,
        "wk": jax.random.normal(ks[2], (D, D), jnp.float32) * s,
        "bk": jax.random.normal(ks[3], (1, D), jnp.float32) * s,
        "wv": jax.random.normal(ks[4], (D, D), jnp.float32) * s,
        "bv": jax.random.normal(ks[5], (1, D), jnp.float32) * s,
        "wo": jax.random.normal(ks[6], (D, D), jnp.float32) * s,
        "bo": jax.random.normal(ks[7], (1, D), jnp.float32) * s,
        # layer norms (eps=0.1 hardcoded in kernel, matching the module)
        "g1": jnp.ones((1, D), jnp.float32),
        "beta1": jnp.zeros((1, D), jnp.float32),
        "g2": jnp.ones((1, D), jnp.float32),
        "beta2": jnp.zeros((1, D), jnp.float32),
        # feed-forward
        "w1": jax.random.normal(ks[8], (D, dim_ff), jnp.float32) * s,
        "b1": jax.random.normal(ks[9], (1, dim_ff), jnp.float32) * s,
        "w2": jax.random.normal(ks[10], (dim_ff, D), jnp.float32) * s,
        "b2": jax.random.normal(ks[11], (1, D), jnp.float32) * s,
        # MLP classifier: D -> 128*D -> 32*D -> n_class
        "wm1": jax.random.normal(ks[12], (D, 128 * D), jnp.float32) * s,
        "bm1": jnp.zeros((1, 128 * D), jnp.float32),
        "wm2": jax.random.normal(ks[13], (128 * D, 32 * D), jnp.float32) * (s / 4),
        "bm2": jnp.zeros((1, 32 * D), jnp.float32),
        "wm3": jax.random.normal(ks[14], (32 * D, n_class), jnp.float32) * (s / 2),
        "bm3": jnp.zeros((1, n_class), jnp.float32),
    }


if __name__ == "__main__":
    B, S, D = 2, 8, 7           # batch, seq, d_model (d_model=7 as in the module)
    dim_ff, n_class = 32, 1
    key = jax.random.PRNGKey(0)
    kx, kp = jax.random.split(key)
    x = jax.random.normal(kx, (B, S, D), jnp.float32)
    params = init_params(kp, D=D, dim_ff=dim_ff, n_class=n_class)
    prepped = prepare_params(params, D=D, dff=dim_ff, n_class=n_class)

    fwd = jax.jit(functools.partial(transformer_mintomics, n_class=n_class))
    cls, attn = fwd(x, prepped)
    jax.block_until_ready((cls, attn))

    cls_ref, attn_ref = reference(x, params)
    assert cls.shape == (B, n_class) and attn.shape == (B, S, S)
    # tolerance covers the deliberate bf16 classifier path, approx softmax
    # reciprocal, and MXU matmul precision differences vs HIGHEST reference
    assert np.allclose(np.asarray(cls), np.asarray(cls_ref), rtol=1e-2, atol=1e-2)
    assert np.allclose(np.asarray(attn), np.asarray(attn_ref), rtol=1e-2, atol=1e-2)

    print("KERNEL_OK")
</pallas_src>

<mosaic_0001>
module attributes {stable_mosaic.version = 11 : i64} {
  func.func @encoder_classifier_kernel(%arg0: memref<2x8x7xf32, #tpu.memory_space<vmem>>, %arg1: memref<72x32xf32, #tpu.memory_space<vmem>>, %arg2: memref<13x896xf32, #tpu.memory_space<vmem>>, %arg3: memref<8x896xbf16, #tpu.memory_space<any>>, %arg4: memref<896x224xbf16, #tpu.memory_space<any>>, %arg5: memref<224x128xbf16, #tpu.memory_space<any>>, %arg6: memref<2x128xf32, #tpu.memory_space<vmem>>, %arg7: memref<2x8x128xf32, #tpu.memory_space<vmem>>, %arg8: memref<8x896xbf16, #tpu.memory_space<vmem>>, %arg9: memref<896x224xbf16, #tpu.memory_space<vmem>>, %arg10: memref<224x128xbf16, #tpu.memory_space<vmem>>, %arg11: memref<3x!tpu.dma_semaphore, #tpu.memory_space<semaphore_mem>>) attributes {dimension_semantics = [], scalar_prefetch = 0 : i64, scratch_operands = 4 : i64, tpu.core_type = #tpu.core_type<tc>} {
    %c0_i32 = arith.constant 0 : i32
    %0 = tpu.memref_slice %arg11[%c0_i32] : memref<3x!tpu.dma_semaphore, #tpu.memory_space<semaphore_mem>> -> memref<1x!tpu.dma_semaphore, #tpu.memory_space<semaphore_mem>>
    %1 = tpu.memref_squeeze %0 : memref<1x!tpu.dma_semaphore, #tpu.memory_space<semaphore_mem>> -> memref<!tpu.dma_semaphore, #tpu.memory_space<semaphore_mem>>
    tpu.enqueue_dma source(%arg3 : memref<8x896xbf16, #tpu.memory_space<any>>) target(%arg8 : memref<8x896xbf16, #tpu.memory_space<vmem>>) target_semaphore(%1 : memref<!tpu.dma_semaphore, #tpu.memory_space<semaphore_mem>>)
    %c1_i32 = arith.constant 1 : i32
    %2 = tpu.memref_slice %arg11[%c1_i32] : memref<3x!tpu.dma_semaphore, #tpu.memory_space<semaphore_mem>> -> memref<1x!tpu.dma_semaphore, #tpu.memory_space<semaphore_mem>>
    %3 = tpu.memref_squeeze %2 : memref<1x!tpu.dma_semaphore, #tpu.memory_space<semaphore_mem>> -> memref<!tpu.dma_semaphore, #tpu.memory_space<semaphore_mem>>
    tpu.enqueue_dma source(%arg4 : memref<896x224xbf16, #tpu.memory_space<any>>) target(%arg9 : memref<896x224xbf16, #tpu.memory_space<vmem>>) target_semaphore(%3 : memref<!tpu.dma_semaphore, #tpu.memory_space<semaphore_mem>>)
    %c2_i32 = arith.constant 2 : i32
    %4 = tpu.memref_slice %arg11[%c2_i32] : memref<3x!tpu.dma_semaphore, #tpu.memory_space<semaphore_mem>> -> memref<1x!tpu.dma_semaphore, #tpu.memory_space<semaphore_mem>>
    %5 = tpu.memref_squeeze %4 : memref<1x!tpu.dma_semaphore, #tpu.memory_space<semaphore_mem>> -> memref<!tpu.dma_semaphore, #tpu.memory_space<semaphore_mem>>
    tpu.enqueue_dma source(%arg5 : memref<224x128xbf16, #tpu.memory_space<any>>) target(%arg10 : memref<224x128xbf16, #tpu.memory_space<vmem>>) target_semaphore(%5 : memref<!tpu.dma_semaphore, #tpu.memory_space<semaphore_mem>>)
    %c0 = arith.constant 0 : index
    %c0_0 = arith.constant 0 : index
    %c0_1 = arith.constant 0 : index
    %6 = vector.load %arg0[%c0, %c0_0, %c0_1] : memref<2x8x7xf32, #tpu.memory_space<vmem>>, vector<2x8x7xf32>
    %7 = vector.shape_cast %6 : vector<2x8x7xf32> to vector<16x7xf32>
    %c0_2 = arith.constant 0 : index
    %c0_3 = arith.constant 0 : index
    %8 = vector.load %arg1[%c0_2, %c0_3] : memref<72x32xf32, #tpu.memory_space<vmem>>, vector<7x7xf32>
    %c0_4 = arith.constant 0 : index
    %c0_5 = arith.constant 0 : index
    %9 = vector.load %arg2[%c0_4, %c0_5] : memref<13x896xf32, #tpu.memory_space<vmem>>, vector<1x7xf32>
    %cst = arith.constant dense<0.000000e+00> : vector<16x7xf32>
    %10 = tpu.matmul %7, %8, %cst {dimension_numbers = #tpu.dot_dimension_numbers<[1], [0], [0], [1], [0, 0, 1, 1], [], []>} : vector<16x7xf32>, vector<7x7xf32>, vector<16x7xf32> -> vector<16x7xf32>
    %11 = vector.broadcast %9 : vector<1x7xf32> to vector<16x7xf32>
    %12 = arith.addf %10, %11 : vector<16x7xf32>
    %13 = vector.shape_cast %12 : vector<16x7xf32> to vector<2x8x7xf32>
    %c8 = arith.constant 8 : index
    %c0_6 = arith.constant 0 : index
    %14 = vector.load %arg1[%c8, %c0_6] : memref<72x32xf32, #tpu.memory_space<vmem>>, vector<7x7xf32>
    %c1 = arith.constant 1 : index
    %c0_7 = arith.constant 0 : index
    %15 = vector.load %arg2[%c1, %c0_7] : memref<13x896xf32, #tpu.memory_space<vmem>>, vector<1x7xf32>
    %cst_8 = arith.constant dense<0.000000e+00> : vector<16x7xf32>
    %16 = tpu.matmul %7, %14, %cst_8 {dimension_numbers = #tpu.dot_dimension_numbers<[1], [0], [0], [1], [0, 0, 1, 1], [], []>} : vector<16x7xf32>, vector<7x7xf32>, vector<16x7xf32> -> vector<16x7xf32>
    %17 = vector.broadcast %15 : vector<1x7xf32> to vector<16x7xf32>
    %18 = arith.addf %16, %17 : vector<16x7xf32>
    %19 = vector.shape_cast %18 : vector<16x7xf32> to vector<2x8x7xf32>
    %c16 = arith.constant 16 : index
    %c0_9 = arith.constant 0 : index
    %20 = vector.load %arg1[%c16, %c0_9] : memref<72x32xf32, #tpu.memory_space<vmem>>, vector<7x7xf32>
    %c2 = arith.constant 2 : index
    %c0_10 = arith.constant 0 : index
    %21 = vector.load %arg2[%c2, %c0_10] : memref<13x896xf32, #tpu.memory_space<vmem>>, vector<1x7xf32>
    %cst_11 = arith.constant dense<0.000000e+00> : vector<16x7xf32>
    %22 = tpu.matmul %7, %20, %cst_11 {dimension_numbers = #tpu.dot_dimension_numbers<[1], [0], [0], [1], [0, 0, 1, 1], [], []>} : vector<16x7xf32>, vector<7x7xf32>, vector<16x7xf32> -> vector<16x7xf32>
    %23 = vector.broadcast %21 : vector<1x7xf32> to vector<16x7xf32>
    %24 = arith.addf %22, %23 : vector<16x7xf32>
    %25 = vector.shape_cast %24 : vector<16x7xf32> to vector<2x8x7xf32>
    "tpu.trace_start"() <{level = 10 : i32, message = "bqd,bkd->bqk"}> : () -> ()
    %cst_12 = arith.constant dense<0.000000e+00> : vector<2x8x8xf32>
    %26 = tpu.matmul %13, %19, %cst_12 {dimension_numbers = #tpu.dot_dimension_numbers<[2], [2], [1], [1], [0, 0, 0, 1, 1, 1], [0], [0]>} : vector<2x8x7xf32>, vector<2x8x7xf32>, vector<2x8x8xf32> -> vector<2x8x8xf32>
    "tpu.trace_stop"() : () -> ()
    %cst_13 = arith.constant dense<0xFF800000> : vector<2x8xf32>
    %27 = vector.multi_reduction <maximumf>, %26, %cst_13 [2] : vector<2x8x8xf32> to vector<2x8xf32>
    %28 = vector.shape_cast %27 : vector<2x8xf32> to vector<2x8x1xf32>
    %29 = vector.broadcast %28 : vector<2x8x1xf32> to vector<2x8x8xf32>
    %30 = arith.subf %26, %29 : vector<2x8x8xf32>
    %31 = math.exp %30 : vector<2x8x8xf32>
    %cst_14 = arith.constant dense<0.000000e+00> : vector<2x8xf32>
    %32 = vector.multi_reduction <add>, %31, %cst_14 [2] : vector<2x8x8xf32> to vector<2x8xf32>
    %33 = vector.shape_cast %32 : vector<2x8xf32> to vector<2x8x1xf32>
    %34 = tpu.reciprocal %33 {approx = true} : vector<2x8x1xf32> -> vector<2x8x1xf32>
    %35 = vector.broadcast %34 : vector<2x8x1xf32> to vector<2x8x8xf32>
    %36 = arith.mulf %31, %35 : vector<2x8x8xf32>
    %37 = tpu.iota {dimensions = array<i32: 0>} : vector<8x128xi32>
    %38 = tpu.iota {dimensions = array<i32: 1>} : vector<8x128xi32>
    %39 = arith.cmpi eq, %37, %38 : vector<8x128xi32>
    %40 = arith.extui %39 : vector<8x128xi1> to vector<8x128xi32>
    %41 = arith.sitofp %40 : vector<8x128xi32> to vector<8x128xf32>
    %42 = vector.shape_cast %36 : vector<2x8x8xf32> to vector<16x8xf32>
    %cst_15 = arith.constant dense<0.000000e+00> : vector<16x128xf32>
    %43 = tpu.matmul %42, %41, %cst_15 {dimension_numbers = #tpu.dot_dimension_numbers<[1], [0], [0], [1], [0, 0, 1, 1], [], []>} : vector<16x8xf32>, vector<8x128xf32>, vector<16x128xf32> -> vector<16x128xf32>
    %44 = vector.shape_cast %43 : vector<16x128xf32> to vector<2x8x128xf32>
    %c0_16 = arith.constant 0 : index
    %c0_17 = arith.constant 0 : index
    %c0_18 = arith.constant 0 : index
    %45 = vector.load %arg7[%c0_16, %c0_17, %c0_18] : memref<2x8x128xf32, #tpu.memory_space<vmem>>, vector<2x8x128xf32>
    tpu.vector_store %arg7[%c0_16, %c0_17, %c0_18], %44 {strides = array<i32>} : memref<2x8x128xf32, #tpu.memory_space<vmem>>, vector<2x8x128xf32>,
    "tpu.trace_start"() <{level = 10 : i32, message = "bqk,bkd->bqd"}> : () -> ()
    %cst_19 = arith.constant dense<0.000000e+00> : vector<2x8x7xf32>
    %46 = tpu.matmul %36, %25, %cst_19 {dimension_numbers = #tpu.dot_dimension_numbers<[2], [1], [1], [2], [0, 0, 0, 1, 1, 2], [0], [0]>} : vector<2x8x8xf32>, vector<2x8x7xf32>, vector<2x8x7xf32> -> vector<2x8x7xf32>
    "tpu.trace_stop"() : () -> ()
    %47 = vector.shape_cast %46 : vector<2x8x7xf32> to vector<16x7xf32>
    %c24 = arith.constant 24 : index
    %c0_20 = arith.constant 0 : index
    %48 = vector.load %arg1[%c24, %c0_20] : memref<72x32xf32, #tpu.memory_space<vmem>>, vector<7x7xf32>
    %c3 = arith.constant 3 : index
    %c0_21 = arith.constant 0 : index
    %49 = vector.load %arg2[%c3, %c0_21] : memref<13x896xf32, #tpu.memory_space<vmem>>, vector<1x7xf32>
    %cst_22 = arith.constant dense<0.000000e+00> : vector<16x7xf32>
    %50 = tpu.matmul %47, %48, %cst_22 {dimension_numbers = #tpu.dot_dimension_numbers<[1], [0], [0], [1], [0, 0, 1, 1], [], []>} : vector<16x7xf32>, vector<7x7xf32>, vector<16x7xf32> -> vector<16x7xf32>
    %51 = vector.broadcast %49 : vector<1x7xf32> to vector<16x7xf32>
    %52 = arith.addf %50, %51 : vector<16x7xf32>
    %53 = arith.addf %7, %52 : vector<16x7xf32>
    %c4 = arith.constant 4 : index
    %c0_23 = arith.constant 0 : index
    %54 = vector.load %arg2[%c4, %c0_23] : memref<13x896xf32, #tpu.memory_space<vmem>>, vector<1x7xf32>
    %c5 = arith.constant 5 : index
    %c0_24 = arith.constant 0 : index
    %55 = vector.load %arg2[%c5, %c0_24] : memref<13x896xf32, #tpu.memory_space<vmem>>, vector<1x7xf32>
    %cst_25 = arith.constant dense<0.000000e+00> : vector<16xf32>
    %56 = vector.multi_reduction <add>, %53, %cst_25 [1] : vector<16x7xf32> to vector<16xf32>
    %57 = vector.shape_cast %56 : vector<16xf32> to vector<16x1xf32>
    %cst_26 = arith.constant 7.000000e+00 : f32
    %58 = vector.broadcast %cst_26 : f32 to vector<16x1xf32>
    %59 = arith.divf %57, %58 : vector<16x1xf32>
    %60 = vector.broadcast %59 : vector<16x1xf32> to vector<16x7xf32>
    %61 = arith.subf %53, %60 : vector<16x7xf32>
    %62 = arith.mulf %61, %61 : vector<16x7xf32>
    %cst_27 = arith.constant dense<0.000000e+00> : vector<16xf32>
    %63 = vector.multi_reduction <add>, %62, %cst_27 [1] : vector<16x7xf32> to vector<16xf32>
    %64 = vector.shape_cast %63 : vector<16xf32> to vector<16x1xf32>
    %cst_28 = arith.constant 7.000000e+00 : f32
    %65 = vector.broadcast %cst_28 : f32 to vector<16x1xf32>
    %66 = arith.divf %64, %65 : vector<16x1xf32>
    %cst_29 = arith.constant 1.000000e-01 : f32
    %67 = vector.broadcast %cst_29 : f32 to vector<16x1xf32>
    %68 = arith.addf %66, %67 : vector<16x1xf32>
    %69 = math.rsqrt %68 : vector<16x1xf32>
    %70 = vector.broadcast %69 : vector<16x1xf32> to vector<16x7xf32>
    %71 = arith.mulf %61, %70 : vector<16x7xf32>
    %72 = vector.broadcast %54 : vector<1x7xf32> to vector<16x7xf32>
    %73 = arith.mulf %71, %72 : vector<16x7xf32>
    %74 = vector.broadcast %55 : vector<1x7xf32> to vector<16x7xf32>
    %75 = arith.addf %73, %74 : vector<16x7xf32>
    %c32 = arith.constant 32 : index
    %c0_30 = arith.constant 0 : index
    %76 = vector.load %arg1[%c32, %c0_30] : memref<72x32xf32, #tpu.memory_space<vmem>>, vector<7x32xf32>
    %c8_31 = arith.constant 8 : index
    %c0_32 = arith.constant 0 : index
    %77 = vector.load %arg2[%c8_31, %c0_32] : memref<13x896xf32, #tpu.memory_space<vmem>>, vector<1x32xf32>
    %cst_33 = arith.constant dense<0.000000e+00> : vector<16x32xf32>
    %78 = tpu.matmul %75, %76, %cst_33 {dimension_numbers = #tpu.dot_dimension_numbers<[1], [0], [0], [1], [0, 0, 1, 1], [], []>} : vector<16x7xf32>, vector<7x32xf32>, vector<16x32xf32> -> vector<16x32xf32>
    %79 = vector.broadcast %77 : vector<1x32xf32> to vector<16x32xf32>
    %80 = arith.addf %78, %79 : vector<16x32xf32>
    %cst_34 = arith.constant 0.000000e+00 : f32
    %81 = vector.broadcast %cst_34 : f32 to vector<16x32xf32>
    %82 = arith.maximumf %80, %81 : vector<16x32xf32>
    %c40 = arith.constant 40 : index
    %c0_35 = arith.constant 0 : index
    %83 = vector.load %arg1[%c40, %c0_35] : memref<72x32xf32, #tpu.memory_space<vmem>>, vector<32x7xf32>
    %c9 = arith.constant 9 : index
    %c0_36 = arith.constant 0 : index
    %84 = vector.load %arg2[%c9, %c0_36] : memref<13x896xf32, #tpu.memory_space<vmem>>, vector<1x7xf32>
    %cst_37 = arith.constant dense<0.000000e+00> : vector<16x7xf32>
    %85 = tpu.matmul %82, %83, %cst_37 {dimension_numbers = #tpu.dot_dimension_numbers<[1], [0], [0], [1], [0, 0, 1, 1], [], []>} : vector<16x32xf32>, vector<32x7xf32>, vector<16x7xf32> -> vector<16x7xf32>
    %86 = vector.broadcast %84 : vector<1x7xf32> to vector<16x7xf32>
    %87 = arith.addf %85, %86 : vector<16x7xf32>
    %88 = arith.addf %75, %87 : vector<16x7xf32>
    %c6 = arith.constant 6 : index
    %c0_38 = arith.constant 0 : index
    %89 = vector.load %arg2[%c6, %c0_38] : memref<13x896xf32, #tpu.memory_space<vmem>>, vector<1x7xf32>
    %c7 = arith.constant 7 : index
    %c0_39 = arith.constant 0 : index
    %90 = vector.load %arg2[%c7, %c0_39] : memref<13x896xf32, #tpu.memory_space<vmem>>, vector<1x7xf32>
    %cst_40 = arith.constant dense<0.000000e+00> : vector<16xf32>
    %91 = vector.multi_reduction <add>, %88, %cst_40 [1] : vector<16x7xf32> to vector<16xf32>
    %92 = vector.shape_cast %91 : vector<16xf32> to vector<16x1xf32>
    %cst_41 = arith.constant 7.000000e+00 : f32
    %93 = vector.broadcast %cst_41 : f32 to vector<16x1xf32>
    %94 = arith.divf %92, %93 : vector<16x1xf32>
    %95 = vector.broadcast %94 : vector<16x1xf32> to vector<16x7xf32>
    %96 = arith.subf %88, %95 : vector<16x7xf32>
    %97 = arith.mulf %96, %96 : vector<16x7xf32>
    %cst_42 = arith.constant dense<0.000000e+00> : vector<16xf32>
    %98 = vector.multi_reduction <add>, %97, %cst_42 [1] : vector<16x7xf32> to vector<16xf32>
    %99 = vector.shape_cast %98 : vector<16xf32> to vector<16x1xf32>
    %cst_43 = arith.constant 7.000000e+00 : f32
    %100 = vector.broadcast %cst_43 : f32 to vector<16x1xf32>
    %101 = arith.divf %99, %100 : vector<16x1xf32>
    %cst_44 = arith.constant 1.000000e-01 : f32
    %102 = vector.broadcast %cst_44 : f32 to vector<16x1xf32>
    %103 = arith.addf %101, %102 : vector<16x1xf32>
    %104 = math.rsqrt %103 : vector<16x1xf32>
    %105 = vector.broadcast %104 : vector<16x1xf32> to vector<16x7xf32>
    %106 = arith.mulf %96, %105 : vector<16x7xf32>
    %107 = vector.broadcast %89 : vector<1x7xf32> to vector<16x7xf32>
    %108 = arith.mulf %106, %107 : vector<16x7xf32>
    %109 = vector.broadcast %90 : vector<1x7xf32> to vector<16x7xf32>
    %110 = arith.addf %108, %109 : vector<16x7xf32>
    %111 = vector.shape_cast %110 : vector<16x7xf32> to vector<2x8x7xf32>
    %cst_45 = arith.constant dense<0.000000e+00> : vector<2x7xf32>
    %112 = vector.multi_reduction <add>, %111, %cst_45 [1] : vector<2x8x7xf32> to vector<2x7xf32>
    %cst_46 = arith.constant 8.000000e+00 : f32
    %113 = vector.broadcast %cst_46 : f32 to vector<2x7xf32>
    %114 = arith.divf %112, %113 : vector<2x7xf32>
    %cst_47 = arith.constant 0.000000e+00 : f32
    %115 = vector.broadcast %cst_47 : f32 to vector<2x7xf32>
    %116 = arith.maximumf %114, %115 : vector<2x7xf32>
    %c0_i32_48 = arith.constant 0 : i32
    %117 = tpu.memref_slice %arg11[%c0_i32_48] : memref<3x!tpu.dma_semaphore, #tpu.memory_space<semaphore_mem>> -> memref<1x!tpu.dma_semaphore, #tpu.memory_space<semaphore_mem>>
    %118 = tpu.memref_squeeze %117 : memref<1x!tpu.dma_semaphore, #tpu.memory_space<semaphore_mem>> -> memref<!tpu.dma_semaphore, #tpu.memory_space<semaphore_mem>>
    tpu.wait_dma2 semaphore(%118 : memref<!tpu.dma_semaphore, #tpu.memory_space<semaphore_mem>>) src(%arg3 : memref<8x896xbf16, #tpu.memory_space<any>>) dst(%arg8 : memref<8x896xbf16, #tpu.memory_space<vmem>>)
    %c1_i32_49 = arith.constant 1 : i32
    %119 = tpu.memref_slice %arg11[%c1_i32_49] : memref<3x!tpu.dma_semaphore, #tpu.memory_space<semaphore_mem>> -> memref<1x!tpu.dma_semaphore, #tpu.memory_space<semaphore_mem>>
    %120 = tpu.memref_squeeze %119 : memref<1x!tpu.dma_semaphore, #tpu.memory_space<semaphore_mem>> -> memref<!tpu.dma_semaphore, #tpu.memory_space<semaphore_mem>>
    tpu.wait_dma2 semaphore(%120 : memref<!tpu.dma_semaphore, #tpu.memory_space<semaphore_mem>>) src(%arg4 : memref<896x224xbf16, #tpu.memory_space<any>>) dst(%arg9 : memref<896x224xbf16, #tpu.memory_space<vmem>>)
    %c2_i32_50 = arith.constant 2 : i32
    %121 = tpu.memref_slice %arg11[%c2_i32_50] : memref<3x!tpu.dma_semaphore, #tpu.memory_space<semaphore_mem>> -> memref<1x!tpu.dma_semaphore, #tpu.memory_space<semaphore_mem>>
    %122 = tpu.memref_squeeze %121 : memref<1x!tpu.dma_semaphore, #tpu.memory_space<semaphore_mem>> -> memref<!tpu.dma_semaphore, #tpu.memory_space<semaphore_mem>>
    tpu.wait_dma2 semaphore(%122 : memref<!tpu.dma_semaphore, #tpu.memory_space<semaphore_mem>>) src(%arg5 : memref<224x128xbf16, #tpu.memory_space<any>>) dst(%arg10 : memref<224x128xbf16, #tpu.memory_space<vmem>>)
    %cst_51 = arith.constant 0.000000e+00 : f32
    %123 = vector.broadcast %cst_51 : f32 to vector<2x1xf32>
    %124 = tpu.concatenate %116, %123 in 1 : vector<2x7xf32>, vector<2x1xf32> -> vector<2x8xf32>
    %125 = arith.truncf %124 : vector<2x8xf32> to vector<2x8xbf16>
    %c0_52 = arith.constant 0 : index
    %c0_53 = arith.constant 0 : index
    %126 = vector.load %arg8[%c0_52, %c0_53] : memref<8x896xbf16, #tpu.memory_space<vmem>>, vector<8x896xbf16>
    %cst_54 = arith.constant dense<0.000000e+00> : vector<2x896xf32>
    %127 = tpu.matmul %125, %126, %cst_54 {dimension_numbers = #tpu.dot_dimension_numbers<[1], [0], [0], [1], [0, 0, 1, 1], [], []>} : vector<2x8xbf16>, vector<8x896xbf16>, vector<2x896xf32> -> vector<2x896xf32>
    %c10 = arith.constant 10 : index
    %c0_55 = arith.constant 0 : index
    %128 = vector.load %arg2[%c10, %c0_55] : memref<13x896xf32, #tpu.memory_space<vmem>>, vector<1x896xf32>
    %129 = vector.broadcast %128 : vector<1x896xf32> to vector<2x896xf32>
    %130 = arith.addf %127, %129 : vector<2x896xf32>
    %cst_56 = arith.constant 0.000000e+00 : f32
    %131 = vector.broadcast %cst_56 : f32 to vector<2x896xf32>
    %132 = arith.maximumf %130, %131 : vector<2x896xf32>
    %133 = arith.truncf %132 : vector<2x896xf32> to vector<2x896xbf16>
    %c0_57 = arith.constant 0 : index
    %c0_58 = arith.constant 0 : index
    %134 = vector.load %arg9[%c0_57, %c0_58] : memref<896x224xbf16, #tpu.memory_space<vmem>>, vector<896x224xbf16>
    %cst_59 = arith.constant dense<0.000000e+00> : vector<2x224xf32>
    %135 = tpu.matmul %133, %134, %cst_59 {dimension_numbers = #tpu.dot_dimension_numbers<[1], [0], [0], [1], [0, 0, 1, 1], [], []>} : vector<2x896xbf16>, vector<896x224xbf16>, vector<2x224xf32> -> vector<2x224xf32>
    %c11 = arith.constant 11 : index
    %c0_60 = arith.constant 0 : index
    %136 = vector.load %arg2[%c11, %c0_60] : memref<13x896xf32, #tpu.memory_space<vmem>>, vector<1x224xf32>
    %137 = vector.broadcast %136 : vector<1x224xf32> to vector<2x224xf32>
    %138 = arith.addf %135, %137 : vector<2x224xf32>
    %cst_61 = arith.constant 0.000000e+00 : f32
    %139 = vector.broadcast %cst_61 : f32 to vector<2x224xf32>
    %140 = arith.maximumf %138, %139 : vector<2x224xf32>
    %141 = arith.truncf %140 : vector<2x224xf32> to vector<2x224xbf16>
    %c0_62 = arith.constant 0 : index
    %c0_63 = arith.constant 0 : index
    %142 = vector.load %arg10[%c0_62, %c0_63] : memref<224x128xbf16, #tpu.memory_space<vmem>>, vector<224x128xbf16>
    %cst_64 = arith.constant dense<0.000000e+00> : vector<2x128xf32>
    %143 = tpu.matmul %141, %142, %cst_64 {dimension_numbers = #tpu.dot_dimension_numbers<[1], [0], [0], [1], [0, 0, 1, 1], [], []>} : vector<2x224xbf16>, vector<224x128xbf16>, vector<2x128xf32> -> vector<2x128xf32>
    %c12 = arith.constant 12 : index
    %c0_65 = arith.constant 0 : index
    %144 = vector.load %arg2[%c12, %c0_65] : memref<13x896xf32, #tpu.memory_space<vmem>>, vector<1x128xf32>
    %145 = vector.broadcast %144 : vector<1x128xf32> to vector<2x128xf32>
    %146 = arith.addf %143, %145 : vector<2x128xf32>
    %c0_66 = arith.constant 0 : index
    %c0_67 = arith.constant 0 : index
    %147 = vector.load %arg6[%c0_66, %c0_67] : memref<2x128xf32, #tpu.memory_space<vmem>>, vector<2x128xf32>
    tpu.vector_store %arg6[%c0_66, %c0_67], %146 {strides = array<i32>} : memref<2x128xf32, #tpu.memory_space<vmem>>, vector<2x128xf32>,
    return
  }
}

</mosaic_0001>

<llo_original>
// kernel: transformer_mintomics.1
$region0: #{transformer_mintomics.1}
  #allocation0 [shape = 'u32[]', space=smem, size = 0x4, offset = 0x4, fixed_abs, tag = 'smem constant byte address 0x4 - core index']
  #allocation1 [shape = 'u32[72,128]{1,0:T(1,128)}', space=vmem, size = 0x9000, scoped, tag = 'internal scratch']
  #allocation2 [shape = 'bf16[8,896]{1,0:T(8,128)(2,1)}', space=vmem, size = 0x3800, scoped, tag = 'scratch operand']
  #allocation3 [shape = 'bf16[896,224]{1,0:T(8,128)(2,1)}', space=vmem, size = 0x70000, scoped, tag = 'scratch operand']
  #allocation4 [shape = 'bf16[224,128]{1,0:T(8,128)(2,1)}', space=vmem, size = 0xe000, scoped, tag = 'scratch operand']
  #allocation5 [shape = 's32[3]{0}', space=sflag, size = 0xc, scoped, tag = 'scratch operand']
  #allocation8 [shape = 's32[]', space=sflag, size = 0x4, offset = 0, fixed_abs, tag = 'sflag constant byte address 0x0 - dummy sync flag']
  #allocation9 [shape = 's32[]', space=sflag, size = 0x4, offset = 0, fixed_abs, tag = 'sflag constant byte address 0x0 - dummy sync flag']
  #allocation10 [shape = 's32[]', space=sflag, size = 0x4, offset = 0, fixed_abs, tag = 'sflag constant byte address 0x0 - dummy sync flag']
  %s0 = inlined_call_operand.vmem [shape: f32[2,8,7], index: 0, kind: input, shape index: {}]
  %s1 = inlined_call_operand.vmem [shape: f32[72,32], index: 1, kind: input, shape index: {}]
  %s2 = inlined_call_operand.vmem [shape: f32[13,896], index: 2, kind: input, shape index: {}]
  %s3 = inlined_call_operand.vmem [shape: bf16[8,896], index: 3, kind: input, shape index: {}]
  %s4 = inlined_call_operand.vmem [shape: bf16[896,224], index: 4, kind: input, shape index: {}]
  %s5 = inlined_call_operand.vmem [shape: bf16[224,128], index: 5, kind: input, shape index: {}]
  %s6 = inlined_call_operand.vmem [shape: f32[2,128], index: 6, kind: output, shape index: {0}]
  %s7 = inlined_call_operand.hbm [shape: f32[2,8,128], index: 7, kind: output, shape index: {1}]
  %8 = xla_tuple %s6, %s7
  %s9 = sld [smem:[#allocation0]]
  $region90: #{transformer_mintomics.1} parent=0
    _
  %s11 = ssub.s32 1, %s9
  %s12 = scalar_select 0, %s11, %s9
  $region1: #{transformer_mintomics.1} parent=0
    #allocation6 [shape = 'u8[8192]{0}', space=vmem, size = 0x2000, scoped, tag = 'output window, operand 1, single buffered']
    #allocation7 [shape = 's32[1]{0}', space=sflag, size = 0x4, scoped, tag = 'scoped memory for transformer_mintomics.1']
    %13 = vsyncpa [#allocation7], 0
    // Predicated region
    $region2: #{transformer_mintomics.1} parent=1 // pred_check
      _
    $region3: #{transformer_mintomics.1} parent=1 // pred_check_branch
      %15 = sbr.rel (0) target = $region5
    $region4: #{transformer_mintomics.1} parent=1 // pred_region
      _
    $region5: #{transformer_mintomics.1} parent=1 // pred_fallthru
      _
    // Predicated region
    $region6: #{transformer_mintomics.1} parent=1 // pred_check
      _
    $region7: #{transformer_mintomics.1} parent=1 // pred_check_branch
      %17 = sbr.rel (0) target = $region9
    $region8: #{transformer_mintomics.1} parent=1 // pred_region
      _
    $region9: #{transformer_mintomics.1} parent=1 // pred_fallthru
      _
    // Predicated region
    $region10: #{transformer_mintomics.1} parent=1 // pred_check
      _
    $region11: #{transformer_mintomics.1} parent=1 // pred_check_branch
      %19 = sbr.rel (0) target = $region13
    $region12: #{transformer_mintomics.1} parent=1 // pred_region
      _
    $region13: #{transformer_mintomics.1} parent=1 // pred_fallthru
      _
    // Predicated region
    $region14: #{transformer_mintomics.1} parent=1 // pred_check
      _
    $region15: #{transformer_mintomics.1} parent=1 // pred_check_branch
      %22 = sbr.rel (0) target = $region17
    $region16: #{transformer_mintomics.1} parent=1 // pred_region
      %s23 = scalar_lea.vmem %s3, 24
      %s24 = scalar_lea.vmem [#allocation2], 24
      loop: start=0, step=1, limit=1
      $region18: #{transformer_mintomics.1} parent=16 // loop_pre_header
        _
      $region19: #{transformer_mintomics.1} parent=16 // loop_header
        %s26 = sphi 0, %s30
        %p27 = scmp.ge.s32.totalorder %s26, 1
        %s31 = sphi %s3, %s3
        %s32 = sphi [#allocation2], [#allocation2]
      $region20: #{transformer_mintomics.1} parent=16 // loop_header_branch
        %29 = sbr.rel (%p27) target = $region24
      $region21: #{transformer_mintomics.1} parent=16 // loop_body
        %v33 = vld [vmem:[%s31] sm:$0xff]
        %34 = vst [vmem:[%s32] sm:$0xff] %v33
        %v35 = vld [vmem:[%s31 + $0x8] sm:$0xff]
        %36 = vst [vmem:[%s32 + $0x8] sm:$0xff] %v35
        %v37 = vld [vmem:[%s31 + $0x10] sm:$0xff]
        %38 = vst [vmem:[%s32 + $0x10] sm:$0xff] %v37
      $region22: #{transformer_mintomics.1} parent=16 // loop_footer
        %s30 = sadd.s32 1, %s26
      $region23: #{transformer_mintomics.1} parent=16 // loop_footer_branch
        %25 = sbr.rel target = $region19
      $region24: #{transformer_mintomics.1} parent=16 // loop_exit
        _
      %s40 = ssub.s32 16, 1
      loop: start=0, step=1, limit=1
      $region25: #{transformer_mintomics.1} parent=16 // loop_pre_header
        _
      $region26: #{transformer_mintomics.1} parent=16 // loop_header
        %s42 = sphi 0, %s46
        %p43 = scmp.ge.s32.totalorder %s42, 1
        %s47 = sphi %s23, %s23
        %s48 = sphi %s24, %s24
      $region27: #{transformer_mintomics.1} parent=16 // loop_header_branch
        %45 = sbr.rel (%p43) target = $region31
      $region28: #{transformer_mintomics.1} parent=16 // loop_body
        %v49 = vld [vmem:[%s47] sm:%s40]
        %50 = vst [vmem:[%s48] sm:%s40] %v49
      $region29: #{transformer_mintomics.1} parent=16 // loop_footer
        %s46 = sadd.s32 1, %s42
      $region30: #{transformer_mintomics.1} parent=16 // loop_footer_branch
        %41 = sbr.rel target = $region26
      $region31: #{transformer_mintomics.1} parent=16 // loop_exit
        _
    $region17: #{transformer_mintomics.1} parent=1 // pred_fallthru
      _
    // Predicated region
    $region32: #{transformer_mintomics.1} parent=1 // pred_check
      _
    $region33: #{transformer_mintomics.1} parent=1 // pred_check_branch
      %53 = sbr.rel (0) target = $region35
    $region34: #{transformer_mintomics.1} parent=1 // pred_region
      %54 = vsyncadd [#allocation5], 448
    $region35: #{transformer_mintomics.1} parent=1 // pred_fallthru
      _
    %s55 = scalar_lea.sflag [#allocation5], 1
    // Predicated region
    $region36: #{transformer_mintomics.1} parent=1 // pred_check
      _
    $region37: #{transformer_mintomics.1} parent=1 // pred_check_branch
      %57 = sbr.rel (0) target = $region39
    $region38: #{transformer_mintomics.1} parent=1 // pred_region
      loop: start=0, step=1, limit=1
      $region40: #{transformer_mintomics.1} parent=38 // loop_pre_header
        _
      $region41: #{transformer_mintomics.1} parent=38 // loop_header
        %s59 = sphi 0, %s63
        %p60 = scmp.ge.s32.totalorder %s59, 1
        %s64 = sphi %s4, %s4
        %s65 = sphi [#allocation3], [#allocation3]
      $region42: #{transformer_mintomics.1} parent=38 // loop_header_branch
        %62 = sbr.rel (%p60) target = $region46
      $region43: #{transformer_mintomics.1} parent=38 // loop_body
        %v66 = vld [vmem:[%s64] sm:$0xff]
        %67 = vst [vmem:[%s65] sm:$0xff] %v66
        %v68 = vld [vmem:[%s64 + $0x8] sm:$0xff]
        %69 = vst [vmem:[%s65 + $0x8] sm:$0xff] %v68
        %v70 = vld [vmem:[%s64 + $0x10] sm:$0xff]
        %71 = vst [vmem:[%s65 + $0x10] sm:$0xff] %v70
        %v72 = vld [vmem:[%s64 + $0x18] sm:$0xff]
        %73 = vst [vmem:[%s65 + $0x18] sm:$0xff] %v72
        %v74 = vld [vmem:[%s64 + $0x20] sm:$0xff]
        %75 = vst [vmem:[%s65 + $0x20] sm:$0xff] %v74
        %v76 = vld [vmem:[%s64 + $0x28] sm:$0xff]
        %77 = vst [vmem:[%s65 + $0x28] sm:$0xff] %v76
        %v78 = vld [vmem:[%s64 + $0x30] sm:$0xff]
        %79 = vst [vmem:[%s65 + $0x30] sm:$0xff] %v78
        %v80 = vld [vmem:[%s64 + $0x38] sm:$0xff]
        %81 = vst [vmem:[%s65 + $0x38] sm:$0xff] %v80
        %v82 = vld [vmem:[%s64 + $0x40] sm:$0xff]
        %83 = vst [vmem:[%s65 + $0x40] sm:$0xff] %v82
        %v84 = vld [vmem:[%s64 + $0x48] sm:$0xff]
        %85 = vst [vmem:[%s65 + $0x48] sm:$0xff] %v84
        %v86 = vld [vmem:[%s64 + $0x50] sm:$0xff]
        %87 = vst [vmem:[%s65 + $0x50] sm:$0xff] %v86
        %v88 = vld [vmem:[%s64 + $0x58] sm:$0xff]
        %89 = vst [vmem:[%s65 + $0x58] sm:$0xff] %v88
        %v90 = vld [vmem:[%s64 + $0x60] sm:$0xff]
        %91 = vst [vmem:[%s65 + $0x60] sm:$0xff] %v90
        %v92 = vld [vmem:[%s64 + $0x68] sm:$0xff]
        %93 = vst [vmem:[%s65 + $0x68] sm:$0xff] %v92
        %v94 = vld [vmem:[%s64 + $0x70] sm:$0xff]
        %95 = vst [vmem:[%s65 + $0x70] sm:$0xff] %v94
        %v96 = vld [vmem:[%s64 + $0x78] sm:$0xff]
        %97 = vst [vmem:[%s65 + $0x78] sm:$0xff] %v96
        %v98 = vld [vmem:[%s64 + $0x80] sm:$0xff]
        %99 = vst [vmem:[%s65 + $0x80] sm:$0xff] %v98
        %v100 = vld [vmem:[%s64 + $0x88] sm:$0xff]
        %101 = vst [vmem:[%s65 + $0x88] sm:$0xff] %v100
        %v102 = vld [vmem:[%s64 + $0x90] sm:$0xff]
        %103 = vst [vmem:[%s65 + $0x90] sm:$0xff] %v102
        %v104 = vld [vmem:[%s64 + $0x98] sm:$0xff]
        %105 = vst [vmem:[%s65 + $0x98] sm:$0xff] %v104
        %v106 = vld [vmem:[%s64 + $0xa0] sm:$0xff]
        %107 = vst [vmem:[%s65 + $0xa0] sm:$0xff] %v106
        %v108 = vld [vmem:[%s64 + $0xa8] sm:$0xff]
        %109 = vst [vmem:[%s65 + $0xa8] sm:$0xff] %v108
        %v110 = vld [vmem:[%s64 + $0xb0] sm:$0xff]
        %111 = vst [vmem:[%s65 + $0xb0] sm:$0xff] %v110
        %v112 = vld [vmem:[%s64 + $0xb8] sm:$0xff]
        %113 = vst [vmem:[%s65 + $0xb8] sm:$0xff] %v112
        %v114 = vld [vmem:[%s64 + $0xc0] sm:$0xff]
        %115 = vst [vmem:[%s65 + $0xc0] sm:$0xff] %v114
        %v116 = vld [vmem:[%s64 + $0xc8] sm:$0xff]
        %117 = vst [vmem:[%s65 + $0xc8] sm:$0xff] %v116
        %v118 = vld [vmem:[%s64 + $0xd0] sm:$0xff]
        %119 = vst [vmem:[%s65 + $0xd0] sm:$0xff] %v118
        %v120 = vld [vmem:[%s64 + $0xd8] sm:$0xff]
        %121 = vst [vmem:[%s65 + $0xd8] sm:$0xff] %v120
        %v122 = vld [vmem:[%s64 + $0xe0] sm:$0xff]
        %123 = vst [vmem:[%s65 + $0xe0] sm:$0xff] %v122
        %v124 = vld [vmem:[%s64 + $0xe8] sm:$0xff]
        %125 = vst [vmem:[%s65 + $0xe8] sm:$0xff] %v124
        %v126 = vld [vmem:[%s64 + $0xf0] sm:$0xff]
        %127 = vst [vmem:[%s65 + $0xf0] sm:$0xff] %v126
        %v128 = vld [vmem:[%s64 + $0xf8] sm:$0xff]
        %129 = vst [vmem:[%s65 + $0xf8] sm:$0xff] %v128
        %v130 = vld [vmem:[%s64 + $0x100] sm:$0xff]
        %131 = vst [vmem:[%s65 + $0x100] sm:$0xff] %v130
        %v132 = vld [vmem:[%s64 + $0x108] sm:$0xff]
        %133 = vst [vmem:[%s65 + $0x108] sm:$0xff] %v132
        %v134 = vld [vmem:[%s64 + $0x110] sm:$0xff]
        %135 = vst [vmem:[%s65 + $0x110] sm:$0xff] %v134
        %v136 = vld [vmem:[%s64 + $0x118] sm:$0xff]
        %137 = vst [vmem:[%s65 + $0x118] sm:$0xff] %v136
        %v138 = vld [vmem:[%s64 + $0x120] sm:$0xff]
        %139 = vst [vmem:[%s65 + $0x120] sm:$0xff] %v138
        %v140 = vld [vmem:[%s64 + $0x128] sm:$0xff]
        %141 = vst [vmem:[%s65 + $0x128] sm:$0xff] %v140
        %v142 = vld [vmem:[%s64 + $0x130] sm:$0xff]
        %143 = vst [vmem:[%s65 + $0x130] sm:$0xff] %v142
        %v144 = vld [vmem:[%s64 + $0x138] sm:$0xff]
        %145 = vst [vmem:[%s65 + $0x138] sm:$0xff] %v144
        %v146 = vld [vmem:[%s64 + $0x140] sm:$0xff]
        %147 = vst [vmem:[%s65 + $0x140] sm:$0xff] %v146
        %v148 = vld [vmem:[%s64 + $0x148] sm:$0xff]
        %149 = vst [vmem:[%s65 + $0x148] sm:$0xff] %v148
        %v150 = vld [vmem:[%s64 + $0x150] sm:$0xff]
        %151 = vst [vmem:[%s65 + $0x150] sm:$0xff] %v150
        %v152 = vld [vmem:[%s64 + $0x158] sm:$0xff]
        %153 = vst [vmem:[%s65 + $0x158] sm:$0xff] %v152
        %v154 = vld [vmem:[%s64 + $0x160] sm:$0xff]
        %155 = vst [vmem:[%s65 + $0x160] sm:$0xff] %v154
        %v156 = vld [vmem:[%s64 + $0x168] sm:$0xff]
        %157 = vst [vmem:[%s65 + $0x168] sm:$0xff] %v156
        %v158 = vld [vmem:[%s64 + $0x170] sm:$0xff]
        %159 = vst [vmem:[%s65 + $0x170] sm:$0xff] %v158
        %v160 = vld [vmem:[%s64 + $0x178] sm:$0xff]
        %161 = vst [vmem:[%s65 + $0x178] sm:$0xff] %v160
        %v162 = vld [vmem:[%s64 + $0x180] sm:$0xff]
        %163 = vst [vmem:[%s65 + $0x180] sm:$0xff] %v162
        %v164 = vld [vmem:[%s64 + $0x188] sm:$0xff]
        %165 = vst [vmem:[%s65 + $0x188] sm:$0xff] %v164
        %v166 = vld [vmem:[%s64 + $0x190] sm:$0xff]
        %167 = vst [vmem:[%s65 + $0x190] sm:$0xff] %v166
        %v168 = vld [vmem:[%s64 + $0x198] sm:$0xff]
        %169 = vst [vmem:[%s65 + $0x198] sm:$0xff] %v168
        %v170 = vld [vmem:[%s64 + $0x1a0] sm:$0xff]
        %171 = vst [vmem:[%s65 + $0x1a0] sm:$0xff] %v170
        %v172 = vld [vmem:[%s64 + $0x1a8] sm:$0xff]
        %173 = vst [vmem:[%s65 + $0x1a8] sm:$0xff] %v172
        %v174 = vld [vmem:[%s64 + $0x1b0] sm:$0xff]
        %175 = vst [vmem:[%s65 + $0x1b0] sm:$0xff] %v174
        %v176 = vld [vmem:[%s64 + $0x1b8] sm:$0xff]
        %177 = vst [vmem:[%s65 + $0x1b8] sm:$0xff] %v176
        %v178 = vld [vmem:[%s64 + $0x1c0] sm:$0xff]
        %179 = vst [vmem:[%s65 + $0x1c0] sm:$0xff] %v178
        %v180 = vld [vmem:[%s64 + $0x1c8] sm:$0xff]
        %181 = vst [vmem:[%s65 + $0x1c8] sm:$0xff] %v180
        %v182 = vld [vmem:[%s64 + $0x1d0] sm:$0xff]
        %183 = vst [vmem:[%s65 + $0x1d0] sm:$0xff] %v182
        %v184 = vld [vmem:[%s64 + $0x1d8] sm:$0xff]
        %185 = vst [vmem:[%s65 + $0x1d8] sm:$0xff] %v184
        %v186 = vld [vmem:[%s64 + $0x1e0] sm:$0xff]
        %187 = vst [vmem:[%s65 + $0x1e0] sm:$0xff] %v186
        %v188 = vld [vmem:[%s64 + $0x1e8] sm:$0xff]
        %189 = vst [vmem:[%s65 + $0x1e8] sm:$0xff] %v188
        %v190 = vld [vmem:[%s64 + $0x1f0] sm:$0xff]
        %191 = vst [vmem:[%s65 + $0x1f0] sm:$0xff] %v190
        %v192 = vld [vmem:[%s64 + $0x1f8] sm:$0xff]
        %193 = vst [vmem:[%s65 + $0x1f8] sm:$0xff] %v192
        %v194 = vld [vmem:[%s64 + $0x200] sm:$0xff]
        %195 = vst [vmem:[%s65 + $0x200] sm:$0xff] %v194
        %v196 = vld [vmem:[%s64 + $0x208] sm:$0xff]
        %197 = vst [vmem:[%s65 + $0x208] sm:$0xff] %v196
        %v198 = vld [vmem:[%s64 + $0x210] sm:$0xff]
        %199 = vst [vmem:[%s65 + $0x210] sm:$0xff] %v198
        %v200 = vld [vmem:[%s64 + $0x218] sm:$0xff]
        %201 = vst [vmem:[%s65 + $0x218] sm:$0xff] %v200
        %v202 = vld [vmem:[%s64 + $0x220] sm:$0xff]
        %203 = vst [vmem:[%s65 + $0x220] sm:$0xff] %v202
        %v204 = vld [vmem:[%s64 + $0x228] sm:$0xff]
        %205 = vst [vmem:[%s65 + $0x228] sm:$0xff] %v204
        %v206 = vld [vmem:[%s64 + $0x230] sm:$0xff]
        %207 = vst [vmem:[%s65 + $0x230] sm:$0xff] %v206
        %v208 = vld [vmem:[%s64 + $0x238] sm:$0xff]
        %209 = vst [vmem:[%s65 + $0x238] sm:$0xff] %v208
        %v210 = vld [vmem:[%s64 + $0x240] sm:$0xff]
        %211 = vst [vmem:[%s65 + $0x240] sm:$0xff] %v210
        %v212 = vld [vmem:[%s64 + $0x248] sm:$0xff]
        %213 = vst [vmem:[%s65 + $0x248] sm:$0xff] %v212
        %v214 = vld [vmem:[%s64 + $0x250] sm:$0xff]
        %215 = vst [vmem:[%s65 + $0x250] sm:$0xff] %v214
        %v216 = vld [vmem:[%s64 + $0x258] sm:$0xff]
        %217 = vst [vmem:[%s65 + $0x258] sm:$0xff] %v216
        %v218 = vld [vmem:[%s64 + $0x260] sm:$0xff]
        %219 = vst [vmem:[%s65 + $0x260] sm:$0xff] %v218
        %v220 = vld [vmem:[%s64 + $0x268] sm:$0xff]
        %221 = vst [vmem:[%s65 + $0x268] sm:$0xff] %v220
        %v222 = vld [vmem:[%s64 + $0x270] sm:$0xff]
        %223 = vst [vmem:[%s65 + $0x270] sm:$0xff] %v222
        %v224 = vld [vmem:[%s64 + $0x278] sm:$0xff]
        %225 = vst [vmem:[%s65 + $0x278] sm:$0xff] %v224
        %v226 = vld [vmem:[%s64 + $0x280] sm:$0xff]
        %227 = vst [vmem:[%s65 + $0x280] sm:$0xff] %v226
        %v228 = vld [vmem:[%s64 + $0x288] sm:$0xff]
        %229 = vst [vmem:[%s65 + $0x288] sm:$0xff] %v228
        %v230 = vld [vmem:[%s64 + $0x290] sm:$0xff]
        %231 = vst [vmem:[%s65 + $0x290] sm:$0xff] %v230
        %v232 = vld [vmem:[%s64 + $0x298] sm:$0xff]
        %233 = vst [vmem:[%s65 + $0x298] sm:$0xff] %v232
        %v234 = vld [vmem:[%s64 + $0x2a0] sm:$0xff]
        %235 = vst [vmem:[%s65 + $0x2a0] sm:$0xff] %v234
        %v236 = vld [vmem:[%s64 + $0x2a8] sm:$0xff]
        %237 = vst [vmem:[%s65 + $0x2a8] sm:$0xff] %v236
        %v238 = vld [vmem:[%s64 + $0x2b0] sm:$0xff]
        %239 = vst [vmem:[%s65 + $0x2b0] sm:$0xff] %v238
        %v240 = vld [vmem:[%s64 + $0x2b8] sm:$0xff]
        %241 = vst [vmem:[%s65 + $0x2b8] sm:$0xff] %v240
        %v242 = vld [vmem:[%s64 + $0x2c0] sm:$0xff]
        %243 = vst [vmem:[%s65 + $0x2c0] sm:$0xff] %v242
        %v244 = vld [vmem:[%s64 + $0x2c8] sm:$0xff]
        %245 = vst [vmem:[%s65 + $0x2c8] sm:$0xff] %v244
        %v246 = vld [vmem:[%s64 + $0x2d0] sm:$0xff]
        %247 = vst [vmem:[%s65 + $0x2d0] sm:$0xff] %v246
        %v248 = vld [vmem:[%s64 + $0x2d8] sm:$0xff]
        %249 = vst [vmem:[%s65 + $0x2d8] sm:$0xff] %v248
        %v250 = vld [vmem:[%s64 + $0x2e0] sm:$0xff]
        %251 = vst [vmem:[%s65 + $0x2e0] sm:$0xff] %v250
        %v252 = vld [vmem:[%s64 + $0x2e8] sm:$0xff]
        %253 = vst [vmem:[%s65 + $0x2e8] sm:$0xff] %v252
        %v254 = vld [vmem:[%s64 + $0x2f0] sm:$0xff]
        %255 = vst [vmem:[%s65 + $0x2f0] sm:$0xff] %v254
        %v256 = vld [vmem:[%s64 + $0x2f8] sm:$0xff]
        %257 = vst [vmem:[%s65 + $0x2f8] sm:$0xff] %v256
        %v258 = vld [vmem:[%s64 + $0x300] sm:$0xff]
        %259 = vst [vmem:[%s65 + $0x300] sm:$0xff] %v258
        %v260 = vld [vmem:[%s64 + $0x308] sm:$0xff]
        %261 = vst [vmem:[%s65 + $0x308] sm:$0xff] %v260
        %v262 = vld [vmem:[%s64 + $0x310] sm:$0xff]
        %263 = vst [vmem:[%s65 + $0x310] sm:$0xff] %v262
        %v264 = vld [vmem:[%s64 + $0x318] sm:$0xff]
        %265 = vst [vmem:[%s65 + $0x318] sm:$0xff] %v264
        %v266 = vld [vmem:[%s64 + $0x320] sm:$0xff]
        %267 = vst [vmem:[%s65 + $0x320] sm:$0xff] %v266
        %v268 = vld [vmem:[%s64 + $0x328] sm:$0xff]
        %269 = vst [vmem:[%s65 + $0x328] sm:$0xff] %v268
        %v270 = vld [vmem:[%s64 + $0x330] sm:$0xff]
        %271 = vst [vmem:[%s65 + $0x330] sm:$0xff] %v270
        %v272 = vld [vmem:[%s64 + $0x338] sm:$0xff]
        %273 = vst [vmem:[%s65 + $0x338] sm:$0xff] %v272
        %v274 = vld [vmem:[%s64 + $0x340] sm:$0xff]
        %275 = vst [vmem:[%s65 + $0x340] sm:$0xff] %v274
        %v276 = vld [vmem:[%s64 + $0x348] sm:$0xff]
        %277 = vst [vmem:[%s65 + $0x348] sm:$0xff] %v276
        %v278 = vld [vmem:[%s64 + $0x350] sm:$0xff]
        %279 = vst [vmem:[%s65 + $0x350] sm:$0xff] %v278
        %v280 = vld [vmem:[%s64 + $0x358] sm:$0xff]
        %281 = vst [vmem:[%s65 + $0x358] sm:$0xff] %v280
        %v282 = vld [vmem:[%s64 + $0x360] sm:$0xff]
        %283 = vst [vmem:[%s65 + $0x360] sm:$0xff] %v282
        %v284 = vld [vmem:[%s64 + $0x368] sm:$0xff]
        %285 = vst [vmem:[%s65 + $0x368] sm:$0xff] %v284
        %v286 = vld [vmem:[%s64 + $0x370] sm:$0xff]
        %287 = vst [vmem:[%s65 + $0x370] sm:$0xff] %v286
        %v288 = vld [vmem:[%s64 + $0x378] sm:$0xff]
        %289 = vst [vmem:[%s65 + $0x378] sm:$0xff] %v288
      $region44: #{transformer_mintomics.1} parent=38 // loop_footer
        %s63 = sadd.s32 1, %s59
      $region45: #{transformer_mintomics.1} parent=38 // loop_footer_branch
        %58 = sbr.rel target = $region41
      $region46: #{transformer_mintomics.1} parent=38 // loop_exit
        _
    $region39: #{transformer_mintomics.1} parent=1 // pred_fallthru
      _
    // Predicated region
    $region47: #{transformer_mintomics.1} parent=1 // pred_check
      _
    $region48: #{transformer_mintomics.1} parent=1 // pred_check_branch
      %291 = sbr.rel target = $region50
    $region49: #{transformer_mintomics.1} parent=1 // pred_region
      _
    $region50: #{transformer_mintomics.1} parent=1 // pred_fallthru
      _
    // Predicated region
    $region51: #{transformer_mintomics.1} parent=1 // pred_check
      _
    $region52: #{transformer_mintomics.1} parent=1 // pred_check_branch
      %294 = sbr.rel (0) target = $region54
    $region53: #{transformer_mintomics.1} parent=1 // pred_region
      %295 = vsyncadd %s55, 14336
    $region54: #{transformer_mintomics.1} parent=1 // pred_fallthru
      _
    %s296 = scalar_lea.sflag [#allocation5], 2
    // Predicated region
    $region55: #{transformer_mintomics.1} parent=1 // pred_check
      _
    $region56: #{transformer_mintomics.1} parent=1 // pred_check_branch
      %298 = sbr.rel (0) target = $region58
    $region57: #{transformer_mintomics.1} parent=1 // pred_region
      loop: start=0, step=1, limit=1
      $region59: #{transformer_mintomics.1} parent=57 // loop_pre_header
        _
      $region60: #{transformer_mintomics.1} parent=57 // loop_header
        %s300 = sphi 0, %s304
        %p301 = scmp.ge.s32.totalorder %s300, 1
        %s305 = sphi %s5, %s5
        %s306 = sphi [#allocation4], [#allocation4]
      $region61: #{transformer_mintomics.1} parent=57 // loop_header_branch
        %303 = sbr.rel (%p301) target = $region65
      $region62: #{transformer_mintomics.1} parent=57 // loop_body
        %v307 = vld [vmem:[%s305] sm:$0xff]
        %308 = vst [vmem:[%s306] sm:$0xff] %v307
        %v309 = vld [vmem:[%s305 + $0x8] sm:$0xff]
        %310 = vst [vmem:[%s306 + $0x8] sm:$0xff] %v309
        %v311 = vld [vmem:[%s305 + $0x10] sm:$0xff]
        %312 = vst [vmem:[%s306 + $0x10] sm:$0xff] %v311
        %v313 = vld [vmem:[%s305 + $0x18] sm:$0xff]
        %314 = vst [vmem:[%s306 + $0x18] sm:$0xff] %v313
        %v315 = vld [vmem:[%s305 + $0x20] sm:$0xff]
        %316 = vst [vmem:[%s306 + $0x20] sm:$0xff] %v315
        %v317 = vld [vmem:[%s305 + $0x28] sm:$0xff]
        %318 = vst [vmem:[%s306 + $0x28] sm:$0xff] %v317
        %v319 = vld [vmem:[%s305 + $0x30] sm:$0xff]
        %320 = vst [vmem:[%s306 + $0x30] sm:$0xff] %v319
        %v321 = vld [vmem:[%s305 + $0x38] sm:$0xff]
        %322 = vst [vmem:[%s306 + $0x38] sm:$0xff] %v321
        %v323 = vld [vmem:[%s305 + $0x40] sm:$0xff]
        %324 = vst [vmem:[%s306 + $0x40] sm:$0xff] %v323
        %v325 = vld [vmem:[%s305 + $0x48] sm:$0xff]
        %326 = vst [vmem:[%s306 + $0x48] sm:$0xff] %v325
        %v327 = vld [vmem:[%s305 + $0x50] sm:$0xff]
        %328 = vst [vmem:[%s306 + $0x50] sm:$0xff] %v327
        %v329 = vld [vmem:[%s305 + $0x58] sm:$0xff]
        %330 = vst [vmem:[%s306 + $0x58] sm:$0xff] %v329
        %v331 = vld [vmem:[%s305 + $0x60] sm:$0xff]
        %332 = vst [vmem:[%s306 + $0x60] sm:$0xff] %v331
        %v333 = vld [vmem:[%s305 + $0x68] sm:$0xff]
        %334 = vst [vmem:[%s306 + $0x68] sm:$0xff] %v333
      $region63: #{transformer_mintomics.1} parent=57 // loop_footer
        %s304 = sadd.s32 1, %s300
      $region64: #{transformer_mintomics.1} parent=57 // loop_footer_branch
        %299 = sbr.rel target = $region60
      $region65: #{transformer_mintomics.1} parent=57 // loop_exit
        _
    $region58: #{transformer_mintomics.1} parent=1 // pred_fallthru
      _
    // Predicated region
    $region66: #{transformer_mintomics.1} parent=1 // pred_check
      _
    $region67: #{transformer_mintomics.1} parent=1 // pred_check_branch
      %336 = sbr.rel target = $region69
    $region68: #{transformer_mintomics.1} parent=1 // pred_region
      _
    $region69: #{transformer_mintomics.1} parent=1 // pred_fallthru
      _
    // Predicated region
    $region70: #{transformer_mintomics.1} parent=1 // pred_check
      _
    $region71: #{transformer_mintomics.1} parent=1 // pred_check_branch
      %339 = sbr.rel (0) target = $region73
    $region72: #{transformer_mintomics.1} parent=1 // pred_region
      %340 = vsyncadd %s296, 1792
    $region73: #{transformer_mintomics.1} parent=1 // pred_fallthru
      _
    %v341 = vld [vmem:[%s0] sm:$0xff]
    %v342 = vld [vmem:[%s0 + $0x8] sm:$0xff]
    %v343 = vld [vmem:[%s1] sm:$0x7f]
    %v344 = vld [vmem:[%s2] ss:$0 sm:$0xff]
    %vm345 = vcmask 56320
    %v347 = vsel %vm345, %v341, 0
    %v350 = vsel %vm345, %v342, 0
    %vm352 = vcmask 1046528
    %v354 = vsel %vm352, %v343, 0
    %356 = vmatpush.msra.mxu0 0.0
    %357 = vmatpush.msra.mxu0 0.0
    %358 = vmatpush.msra.mxu0 0.0
    %359 = vmatpush.msra.mxu0 0.0
    %360 = vmatpush.msra.mxu0 0.0
    %361 = vmatpush.msra.mxu0 0.0
    %362 = vmatpush.msra.mxu0 0.0
    %363 = vmatpush.msra.mxu0 0.0
    %364 = vmatpush.msra.mxu0 0.0
    %365 = vmatpush.msra.mxu0 0.0
    %366 = vmatpush.msra.mxu0 0.0
    %367 = vmatpush.msra.mxu0 0.0
    %368 = vmatpush.msra.mxu0 0.0
    %369 = vmatpush.msra.mxu0 0.0
    %370 = vmatpush.msra.mxu0 0.0
    %371 = vmatpush.msra.mxu0 %v354
    %372 = vmatmul.f32.gmra.mxu0 %v347
    %v373 = vpop.f32.mrf.mxu0
    %v374 = vadd.f32 %v344, %v373
    %375 = vmatmul.f32.gmra.mxu0 %v350
    %v376 = vpop.f32.mrf.mxu0
    %v377 = vadd.f32 %v344, %v376
    %378 = vdwg.mxu0
    %v379 = vld [vmem:[%s1 + $0x8] sm:$0x7f]
    %v380 = vld [vmem:[%s2 + $0x1] ss:$0 sm:$0xff]
    %v382 = vsel %vm352, %v379, 0
    %384 = vmatpush.msra.mxu0 0.0
    %385 = vmatpush.msra.mxu0 0.0
    %386 = vmatpush.msra.mxu0 0.0
    %387 = vmatpush.msra.mxu0 0.0
    %388 = vmatpush.msra.mxu0 0.0
    %389 = vmatpush.msra.mxu0 0.0
    %390 = vmatpush.msra.mxu0 0.0
    %391 = vmatpush.msra.mxu0 0.0
    %392 = vmatpush.msra.mxu0 0.0
    %393 = vmatpush.msra.mxu0 0.0
    %394 = vmatpush.msra.mxu0 0.0
    %395 = vmatpush.msra.mxu0 0.0
    %396 = vmatpush.msra.mxu0 0.0
    %397 = vmatpush.msra.mxu0 0.0
    %398 = vmatpush.msra.mxu0 0.0
    %399 = vmatpush.msra.mxu0 %v382
    %400 = vmatmul.f32.gmra.mxu0 %v347
    %v401 = vpop.f32.mrf.mxu0
    %v402 = vadd.f32 %v380, %v401
    %403 = vmatmul.f32.gmra.mxu0 %v350
    %v404 = vpop.f32.mrf.mxu0
    %v405 = vadd.f32 %v380, %v404
    %406 = vdwg.mxu0
    %v407 = vld [vmem:[%s1 + $0x10] sm:$0x7f]
    %v408 = vld [vmem:[%s2 + $0x2] ss:$0 sm:$0xff]
    %v410 = vsel %vm352, %v407, 0
    %412 = vmatpush.msra.mxu0 0.0
    %413 = vmatpush.msra.mxu0 0.0
    %414 = vmatpush.msra.mxu0 0.0
    %415 = vmatpush.msra.mxu0 0.0
    %416 = vmatpush.msra.mxu0 0.0
    %417 = vmatpush.msra.mxu0 0.0
    %418 = vmatpush.msra.mxu0 0.0
    %419 = vmatpush.msra.mxu0 0.0
    %420 = vmatpush.msra.mxu0 0.0
    %421 = vmatpush.msra.mxu0 0.0
    %422 = vmatpush.msra.mxu0 0.0
    %423 = vmatpush.msra.mxu0 0.0
    %424 = vmatpush.msra.mxu0 0.0
    %425 = vmatpush.msra.mxu0 0.0
    %426 = vmatpush.msra.mxu0 0.0
    %427 = vmatpush.msra.mxu0 %v410
    %428 = vmatmul.f32.gmra.mxu0 %v347
    %v429 = vpop.f32.mrf.mxu0
    %v430 = vadd.f32 %v408, %v429
    %431 = vmatmul.f32.gmra.mxu0 %v350
    %v432 = vpop.f32.mrf.mxu0
    %v433 = vadd.f32 %v408, %v432
    %434 = vdwg.mxu0
    %v436 = vsel %vm345, %v374, 0
    %v439 = vsel %vm345, %v402, 0
    %441 = vmatpush.xpose.msra.mxu0 0.0
    %442 = vmatpush.xpose.msra.mxu0 0.0
    %443 = vmatpush.xpose.msra.mxu0 0.0
    %444 = vmatpush.xpose.msra.mxu0 0.0
    %445 = vmatpush.xpose.msra.mxu0 0.0
    %446 = vmatpush.xpose.msra.mxu0 0.0
    %447 = vmatpush.xpose.msra.mxu0 0.0
    %448 = vmatpush.xpose.msra.mxu0 0.0
    %449 = vmatpush.xpose.msra.mxu0 0.0
    %450 = vmatpush.xpose.msra.mxu0 0.0
    %451 = vmatpush.xpose.msra.mxu0 0.0
    %452 = vmatpush.xpose.msra.mxu0 0.0
    %453 = vmatpush.xpose.msra.mxu0 0.0
    %454 = vmatpush.xpose.msra.mxu0 0.0
    %455 = vmatpush.xpose.msra.mxu0 0.0
    %456 = vmatpush.xpose.msra.mxu0 %v439
    %457 = vmatmul.f32.gmra.mxu0 %v436
    %v458 = vpop.f32.mrf.mxu0
    %v459 = vadd.f32 0.0, %v458
    %460 = vdwg.mxu0
    %v462 = vsel %vm345, %v377, 0
    %v465 = vsel %vm345, %v405, 0
    %467 = vmatpush.xpose.msra.mxu0 0.0
    %468 = vmatpush.xpose.msra.mxu0 0.0
    %469 = vmatpush.xpose.msra.mxu0 0.0
    %470 = vmatpush.xpose.msra.mxu0 0.0
    %471 = vmatpush.xpose.msra.mxu0 0.0
    %472 = vmatpush.xpose.msra.mxu0 0.0
    %473 = vmatpush.xpose.msra.mxu0 0.0
    %474 = vmatpush.xpose.msra.mxu0 0.0
    %475 = vmatpush.xpose.msra.mxu0 0.0
    %476 = vmatpush.xpose.msra.mxu0 0.0
    %477 = vmatpush.xpose.msra.mxu0 0.0
    %478 = vmatpush.xpose.msra.mxu0 0.0
    %479 = vmatpush.xpose.msra.mxu0 0.0
    %480 = vmatpush.xpose.msra.mxu0 0.0
    %481 = vmatpush.xpose.msra.mxu0 0.0
    %482 = vmatpush.xpose.msra.mxu0 %v465
    %483 = vmatmul.f32.gmra.mxu0 %v462
    %v484 = vpop.f32.mrf.mxu0
    %v485 = vadd.f32 0.0, %v484
    %486 = vdwg.mxu0
    %vm487 = vcmask 64512
    %v488 = vsel %vm487, %v459, -inf
    %489 = vmax.xlane.f32.xlu0 %v488
    %v490 = vpop.xlane.xlu0 %489
    %v491 = vsel %vm487, %v485, -inf
    %492 = vmax.xlane.f32.xlu0 %v491
    %v493 = vpop.xlane.xlu0 %492
    %v494 = vsub.f32 %v459, %v490
    %v495 = vsub.f32 %v485, %v493
    %v496 = vmul.f32 %v494, 1.442695
    %v497 = vpow.pop %v496
    %v498 = vmul.f32 %v495, 1.442695
    %v499 = vpow.pop %v498
    %v500 = vsel %vm487, %v497, 0.0
    %501 = vadd.xlane.f32.xlu0 %v500
    %v502 = vpop.xlane.xlu0 %501
    %v503 = vsel %vm487, %v499, 0.0
    %504 = vadd.xlane.f32.xlu0 %v503
    %v505 = vpop.xlane.xlu0 %504
    %v506 = vrcp.pop %v502
    %v507 = vrcp.pop %v505
    %v508 = vmul.f32 %v497, %v506
    %v509 = vmul.f32 %v499, %v507
    %v510 = vlaneseq
    %v511 = vshrl.u32 %v510, 7
    %v512 = vlaneseq
    %v513 = vand.u32 %v512, 127
    %vm514 = vcmp.eq.s32.totalorder %v511, %v513
    %v515 = vsel %vm514, 1, 0
    %v516 = vcvt.s32.f32 %v515
    %v518 = vsel %vm487, %v508, 0
    %v521 = vsel %vm487, %v509, 0
    %523 = vmatpush.msra.mxu0 0.0
    %524 = vmatpush.msra.mxu0 0.0
    %525 = vmatpush.msra.mxu0 0.0
    %526 = vmatpush.msra.mxu0 0.0
    %527 = vmatpush.msra.mxu0 0.0
    %528 = vmatpush.msra.mxu0 0.0
    %529 = vmatpush.msra.mxu0 0.0
    %530 = vmatpush.msra.mxu0 0.0
    %531 = vmatpush.msra.mxu0 0.0
    %532 = vmatpush.msra.mxu0 0.0
    %533 = vmatpush.msra.mxu0 0.0
    %534 = vmatpush.msra.mxu0 0.0
    %535 = vmatpush.msra.mxu0 0.0
    %536 = vmatpush.msra.mxu0 0.0
    %537 = vmatpush.msra.mxu0 0.0
    %538 = vmatpush.msra.mxu0 %v516
    %539 = vmatmul.f32.gmra.mxu0 %v518
    %v540 = vpop.f32.mrf.mxu0
    %v541 = vadd.f32 0.0, %v540
    %542 = vmatmul.f32.gmra.mxu0 %v521
    %v543 = vpop.f32.mrf.mxu0
    %v544 = vadd.f32 0.0, %v543
    %545 = vdwg.mxu0
    %546 = vst [vmem:[#allocation6] sm:$0xff] %v541
    %547 = vst [vmem:[#allocation6 + $0x8] sm:$0xff] %v544
    %548 = vmatpush.msra.mxu0 0.0
    %549 = vmatpush.msra.mxu0 0.0
    %550 = vmatpush.msra.mxu0 0.0
    %551 = vmatpush.msra.mxu0 0.0
    %552 = vmatpush.msra.mxu0 0.0
    %553 = vmatpush.msra.mxu0 0.0
    %554 = vmatpush.msra.mxu0 0.0
    %555 = vmatpush.msra.mxu0 0.0
    %556 = vmatpush.msra.mxu0 0.0
    %557 = vmatpush.msra.mxu0 0.0
    %558 = vmatpush.msra.mxu0 0.0
    %559 = vmatpush.msra.mxu0 0.0
    %560 = vmatpush.msra.mxu0 0.0
    %561 = vmatpush.msra.mxu0 0.0
    %562 = vmatpush.msra.mxu0 0.0
    %563 = vmatpush.msra.mxu0 %v430
    %564 = vmatmul.f32.gmra.mxu0 %v518
    %v565 = vpop.f32.mrf.mxu0
    %v566 = vadd.f32 0.0, %v565
    %567 = vdwg.mxu0
    %568 = vmatpush.msra.mxu0 0.0
    %569 = vmatpush.msra.mxu0 0.0
    %570 = vmatpush.msra.mxu0 0.0
    %571 = vmatpush.msra.mxu0 0.0
    %572 = vmatpush.msra.mxu0 0.0
    %573 = vmatpush.msra.mxu0 0.0
    %574 = vmatpush.msra.mxu0 0.0
    %575 = vmatpush.msra.mxu0 0.0
    %576 = vmatpush.msra.mxu0 0.0
    %577 = vmatpush.msra.mxu0 0.0
    %578 = vmatpush.msra.mxu0 0.0
    %579 = vmatpush.msra.mxu0 0.0
    %580 = vmatpush.msra.mxu0 0.0
    %581 = vmatpush.msra.mxu0 0.0
    %582 = vmatpush.msra.mxu0 0.0
    %583 = vmatpush.msra.mxu0 %v433
    %584 = vmatmul.f32.gmra.mxu0 %v521
    %v585 = vpop.f32.mrf.mxu0
    %v586 = vadd.f32 0.0, %v585
    %587 = vdwg.mxu0
    %v588 = vld [vmem:[%s1 + $0x18] sm:$0x7f]
    %v589 = vld [vmem:[%s2 + $0x3] ss:$0 sm:$0xff]
    %v591 = vsel %vm345, %v566, 0
    %v594 = vsel %vm345, %v586, 0
    %v597 = vsel %vm352, %v588, 0
    %599 = vmatpush.msra.mxu0 0.0
    %600 = vmatpush.msra.mxu0 0.0
    %601 = vmatpush.msra.mxu0 0.0
    %602 = vmatpush.msra.mxu0 0.0
    %603 = vmatpush.msra.mxu0 0.0
    %604 = vmatpush.msra.mxu0 0.0
    %605 = vmatpush.msra.mxu0 0.0
    %606 = vmatpush.msra.mxu0 0.0
    %607 = vmatpush.msra.mxu0 0.0
    %608 = vmatpush.msra.mxu0 0.0
    %609 = vmatpush.msra.mxu0 0.0
    %610 = vmatpush.msra.mxu0 0.0
    %611 = vmatpush.msra.mxu0 0.0
    %612 = vmatpush.msra.mxu0 0.0
    %613 = vmatpush.msra.mxu0 0.0
    %614 = vmatpush.msra.mxu0 %v597
    %615 = vmatmul.f32.gmra.mxu0 %v591
    %v616 = vpop.f32.mrf.mxu0
    %v617 = vadd.f32 %v589, %v616
    %618 = vmatmul.f32.gmra.mxu0 %v594
    %v619 = vpop.f32.mrf.mxu0
    %v620 = vadd.f32 %v589, %v619
    %621 = vdwg.mxu0
    %v622 = vadd.f32 %v341, %v617
    %v623 = vadd.f32 %v342, %v620
    %v624 = vld [vmem:[%s2 + $0x4] ss:$0 sm:$0xff]
    %v625 = vld [vmem:[%s2 + $0x5] ss:$0 sm:$0xff]
    %v626 = vsel %vm345, %v622, 0.0
    %627 = vadd.xlane.f32.xlu0 %v626
    %v628 = vpop.xlane.xlu0 %627
    %v629 = vsel %vm345, %v623, 0.0
    %630 = vadd.xlane.f32.xlu0 %v629
    %v631 = vpop.xlane.xlu0 %630
    %v632 = vrcp.pop 7.0
    %v633 = vmul.f32 7.0, %v632
    %v634 = vsub.f32 1.0, %v633
    %v635 = vmul.f32 %v632, %v634
    %v636 = vadd.f32 %v632, %v635
    %vm637 = vweird.f32 %v632
    %v638 = vsel %vm637, %v632, %v636
    %v639 = vmul.f32 %v628, %v638
    %v640 = vmul.f32 %v631, %v638
    %v641 = vsub.f32 %v622, %v639
    %v642 = vsub.f32 %v623, %v640
    %v643 = vmul.f32 %v641, %v641
    %v644 = vmul.f32 %v642, %v642
    %v645 = vsel %vm345, %v643, 0.0
    %646 = vadd.xlane.f32.xlu0 %v645
    %v647 = vpop.xlane.xlu0 %646
    %v648 = vsel %vm345, %v644, 0.0
    %649 = vadd.xlane.f32.xlu0 %v648
    %v650 = vpop.xlane.xlu0 %649
    %v651 = vmul.f32 %v647, %v638
    %v652 = vmul.f32 %v650, %v638
    %v653 = vadd.f32 %v651, 0.1
    %v654 = vadd.f32 %v652, 0.1
    %v655 = vrsqrt.pop %v653
    %v656 = vmul.f32 %v655, %v653
    %v657 = vmul.f32 %v656, %v655
    %v658 = vmul.f32 0.5, %v657
    %v659 = vsub.f32 1.5, %v658
    %v660 = vmul.f32 %v655, %v659
    %vm661 = vweird.f32 %v653
    %vm662 = vweird.f32 %v655
    %vm663 = vmor %vm661, %vm662
    %v664 = vsel %vm663, %v655, %v660
    %v665 = vrsqrt.pop %v654
    %v666 = vmul.f32 %v665, %v654
    %v667 = vmul.f32 %v666, %v665
    %v668 = vmul.f32 0.5, %v667
    %v669 = vsub.f32 1.5, %v668
    %v670 = vmul.f32 %v665, %v669
    %vm671 = vweird.f32 %v654
    %vm672 = vweird.f32 %v665
    %vm673 = vmor %vm671, %vm672
    %v674 = vsel %vm673, %v665, %v670
    %v675 = vmul.f32 %v641, %v664
    %v676 = vmul.f32 %v642, %v674
    %v677 = vmul.f32 %v675, %v624
    %v678 = vmul.f32 %v676, %v624
    %v679 = vadd.f32 %v677, %v625
    %v680 = vadd.f32 %v678, %v625
    %v681 = vld [vmem:[%s1 + $0x20] sm:$0x7f]
    %v682 = vld [vmem:[%s2 + $0x38] ss:$0 sm:$0xff]
    %v684 = vsel %vm345, %v679, 0
    %v687 = vsel %vm345, %v680, 0
    %v690 = vsel %vm352, %v681, 0
    %692 = vmatpush.msra.mxu0 0.0
    %693 = vmatpush.msra.mxu0 0.0
    %694 = vmatpush.msra.mxu0 0.0
    %695 = vmatpush.msra.mxu0 0.0
    %696 = vmatpush.msra.mxu0 0.0
    %697 = vmatpush.msra.mxu0 0.0
    %698 = vmatpush.msra.mxu0 0.0
    %699 = vmatpush.msra.mxu0 0.0
    %700 = vmatpush.msra.mxu0 0.0
    %701 = vmatpush.msra.mxu0 0.0
    %702 = vmatpush.msra.mxu0 0.0
    %703 = vmatpush.msra.mxu0 0.0
    %704 = vmatpush.msra.mxu0 0.0
    %705 = vmatpush.msra.mxu0 0.0
    %706 = vmatpush.msra.mxu0 0.0
    %707 = vmatpush.msra.mxu0 %v690
    %708 = vmatmul.f32.gmra.mxu0 %v684
    %v709 = vpop.f32.mrf.mxu0
    %v710 = vadd.f32 %v682, %v709
    %711 = vmatmul.f32.gmra.mxu0 %v687
    %v712 = vpop.f32.mrf.mxu0
    %v713 = vadd.f32 %v682, %v712
    %714 = vdwg.mxu0
    %v715 = vmax.f32 %v710, 0.0
    %v716 = vmax.f32 %v713, 0.0
    %v717 = vld [vmem:[%s1 + $0x28] sm:$0xff]
    %v718 = vld [vmem:[%s1 + $0x30] sm:$0xff]
    %v719 = vld [vmem:[%s1 + $0x38] sm:$0xff]
    %v720 = vld [vmem:[%s1 + $0x40] sm:$0xff]
    %v721 = vld [vmem:[%s2 + $0x39] ss:$0 sm:$0xff]
    %vm722 = vcmask 261120
    %v724 = vsel %vm722, %v715, 0
    %v727 = vsel %vm722, %v716, 0
    %729 = vmatpush.msra.mxu0 0.0
    %730 = vmatpush.msra.mxu0 0.0
    %731 = vmatpush.msra.mxu0 0.0
    %732 = vmatpush.msra.mxu0 0.0
    %733 = vmatpush.msra.mxu0 0.0
    %734 = vmatpush.msra.mxu0 0.0
    %735 = vmatpush.msra.mxu0 0.0
    %736 = vmatpush.msra.mxu0 0.0
    %737 = vmatpush.msra.mxu0 0.0
    %738 = vmatpush.msra.mxu0 0.0
    %739 = vmatpush.msra.mxu0 0.0
    %740 = vmatpush.msra.mxu0 0.0
    %741 = vmatpush.msra.mxu0 %v720
    %742 = vmatpush.msra.mxu0 %v719
    %743 = vmatpush.msra.mxu0 %v718
    %744 = vmatpush.msra.mxu0 %v717
    %745 = vmatmul.f32.gmra.mxu0 %v724
    %v746 = vpop.f32.mrf.mxu0
    %v747 = vadd.f32 %v721, %v746
    %748 = vmatmul.f32.gmra.mxu0 %v727
    %v749 = vpop.f32.mrf.mxu0
    %v750 = vadd.f32 %v721, %v749
    %751 = vdwg.mxu0
    %v752 = vadd.f32 %v679, %v747
    %v753 = vadd.f32 %v680, %v750
    %v754 = vld [vmem:[%s2 + $0x6] ss:$0 sm:$0xff]
    %v755 = vld [vmem:[%s2 + $0x7] ss:$0 sm:$0xff]
    %v756 = vsel %vm345, %v752, 0.0
    %757 = vadd.xlane.f32.xlu0 %v756
    %v758 = vpop.xlane.xlu0 %757
    %v759 = vsel %vm345, %v753, 0.0
    %760 = vadd.xlane.f32.xlu0 %v759
    %v761 = vpop.xlane.xlu0 %760
    %v762 = vmul.f32 %v758, %v638
    %v763 = vmul.f32 %v761, %v638
    %v764 = vsub.f32 %v752, %v762
    %v765 = vsub.f32 %v753, %v763
    %v766 = vmul.f32 %v764, %v764
    %v767 = vmul.f32 %v765, %v765
    %v768 = vsel %vm345, %v766, 0.0
    %769 = vadd.xlane.f32.xlu0 %v768
    %v770 = vpop.xlane.xlu0 %769
    %v771 = vsel %vm345, %v767, 0.0
    %772 = vadd.xlane.f32.xlu0 %v771
    %v773 = vpop.xlane.xlu0 %772
    %v774 = vmul.f32 %v770, %v638
    %v775 = vmul.f32 %v773, %v638
    %v776 = vadd.f32 %v774, 0.1
    %v777 = vadd.f32 %v775, 0.1
    %v778 = vrsqrt.pop %v776
    %v779 = vmul.f32 %v778, %v776
    %v780 = vmul.f32 %v779, %v778
    %v781 = vmul.f32 0.5, %v780
    %v782 = vsub.f32 1.5, %v781
    %v783 = vmul.f32 %v778, %v782
    %vm784 = vweird.f32 %v776
    %vm785 = vweird.f32 %v778
    %vm786 = vmor %vm784, %vm785
    %v787 = vsel %vm786, %v778, %v783
    %v788 = vrsqrt.pop %v777
    %v789 = vmul.f32 %v788, %v777
    %v790 = vmul.f32 %v789, %v788
    %v791 = vmul.f32 0.5, %v790
    %v792 = vsub.f32 1.5, %v791
    %v793 = vmul.f32 %v788, %v792
    %vm794 = vweird.f32 %v777
    %vm795 = vweird.f32 %v788
    %vm796 = vmor %vm794, %vm795
    %v797 = vsel %vm796, %v788, %v793
    %v798 = vmul.f32 %v764, %v787
    %v799 = vmul.f32 %v765, %v797
    %v800 = vmul.f32 %v798, %v754
    %v801 = vmul.f32 %v799, %v754
    %v802 = vadd.f32 %v800, %v755
    %v803 = vadd.f32 %v801, %v755
    %v804 = vsel %vm345, %v802, 0.0
    %v805 = vrot.slane %v804, 4
    %v806 = vadd.f32 %v804, %v805
    %v807 = vrot.slane %v806, 2
    %v808 = vadd.f32 %v806, %v807
    %v809 = vrot.slane %v808, 1
    %v810 = vadd.f32 %v808, %v809
    %v811 = vsel %vm345, %v803, 0.0
    %v812 = vrot.slane %v811, 4
    %v813 = vadd.f32 %v811, %v812
    %v814 = vrot.slane %v813, 2
    %v815 = vadd.f32 %v813, %v814
    %v816 = vrot.slane %v815, 1
    %v817 = vadd.f32 %v815, %v816
    %v818 = vrcp.pop 8.0
    %v819 = vmul.f32 8.0, %v818
    %v820 = vsub.f32 1.0, %v819
    %v821 = vmul.f32 %v818, %v820
    %v822 = vadd.f32 %v818, %v821
    %vm823 = vweird.f32 %v818
    %v824 = vsel %vm823, %v818, %v822
    %v825 = vmul.f32 %v810, %v824
    %v826 = vmul.f32 %v817, %v824
    %v827 = vmax.f32 %v825, 0.0
    %v828 = vmax.f32 %v826, 0.0
    %s829 = smul.u32 4, 1
    %s830 = smul.u32 %s829, 7
    %s831 = sshll.u32 %s830, 4
    %832 = dma.done [#allocation5], %s831
    %s833 = smul.u32 4, 112
    %s834 = smul.u32 %s833, 2
    %s835 = sshll.u32 %s834, 4
    %836 = dma.done %s55, %s835
    %s837 = smul.u32 4, 28
    %s838 = smul.u32 %s837, 1
    %s839 = sshll.u32 %s838, 4
    %840 = dma.done %s296, %s839
    %vm843 = vcmask 1041409
    %v844 = vsel %vm843, %v828, %v827
    %v846 = vsel %vm345, %v844, 0.0
    %v847 = vpack.c.bf16 %v846, %v846
    %v848 = vld [vmem:[#allocation2] sm:$0xff]
    %v849 = vld [vmem:[#allocation2 + $0x8] sm:$0xff]
    %v850 = vld [vmem:[#allocation2 + $0x10] sm:$0xff]
    %v851 = vld [vmem:[#allocation2 + $0x18] sm:$0xf]
    %s852 = scalar_lea.vmem %s2, 58
    %v853 = vld [vmem:[%s852] ss:$8 sm:$0xf]
    %v854 = vld [vmem:[%s852] ss:$8 sm:$0xf0]
    %v855 = vor.u32 %v853, %v854
    %v857 = vperm.slane %v855, 0
    %v858 = vperm.slane %v855, 1
    %v859 = vperm.slane %v855, 2
    %v860 = vperm.slane %v855, 3
    %v861 = vperm.slane %v855, 4
    %v862 = vperm.slane %v855, 5
    %v863 = vperm.slane %v855, 6
    %v875 = vunpack.c.l.b16 %v848
    %v876 = vunpack.c.h.b16 %v848
    %v877 = vunpack.c.l.b16 %v849
    %v878 = vunpack.c.h.b16 %v849
    %v879 = vunpack.c.l.b16 %v850
    %v880 = vunpack.c.h.b16 %v850
    %v881 = vunpack.c.l.b16 %v851
    %v882 = vpack.c.b16 %v875, %v875
    %v883 = vpack.c.b16 %v876, %v876
    %v884 = vpack.c.b16 %v877, %v877
    %v885 = vpack.c.b16 %v878, %v878
    %v886 = vpack.c.b16 %v879, %v879
    %v887 = vpack.c.b16 %v880, %v880
    %v888 = vpack.c.b16 %v881, %v881
    %v890 = vsel %vm487, %v847, 0
    %vm892 = vcmask 1043456
    %v894 = vsel %vm892, %v882, 0
    %v897 = vsel %vm892, %v883, 0
    %v900 = vsel %vm892, %v884, 0
    %v903 = vsel %vm892, %v885, 0
    %v906 = vsel %vm892, %v886, 0
    %v909 = vsel %vm892, %v887, 0
    %v912 = vsel %vm892, %v888, 0
    %914 = vmatpush.bf16.msra.mxu0 0
    %915 = vmatpush.bf16.msra.mxu0 0
    %916 = vmatpush.bf16.msra.mxu0 0
    %917 = vmatpush.bf16.msra.mxu0 0
    %918 = vmatpush.bf16.msra.mxu0 0
    %919 = vmatpush.bf16.msra.mxu0 0
    %920 = vmatpush.bf16.msra.mxu0 0
    %921 = vmatpush.bf16.msra.mxu0 %v894
    %922 = vmatmul.bf16.gmra.mxu0 %v890
    %v923 = vpop.f32.mrf.mxu0
    %v924 = vadd.f32 %v857, %v923
    %v925 = vpop.f32.mrf.mxu0
    %926 = vdwg.mxu0
    %927 = vmatpush.bf16.msra.mxu0 0
    %928 = vmatpush.bf16.msra.mxu0 0
    %929 = vmatpush.bf16.msra.mxu0 0
    %930 = vmatpush.bf16.msra.mxu0 0
    %931 = vmatpush.bf16.msra.mxu0 0
    %932 = vmatpush.bf16.msra.mxu0 0
    %933 = vmatpush.bf16.msra.mxu0 0
    %934 = vmatpush.bf16.msra.mxu0 %v897
    %935 = vmatmul.bf16.gmra.mxu0 %v890
    %v936 = vpop.f32.mrf.mxu0
    %v937 = vadd.f32 %v858, %v936
    %v938 = vpop.f32.mrf.mxu0
    %939 = vdwg.mxu0
    %940 = vmatpush.bf16.msra.mxu0 0
    %941 = vmatpush.bf16.msra.mxu0 0
    %942 = vmatpush.bf16.msra.mxu0 0
    %943 = vmatpush.bf16.msra.mxu0 0
    %944 = vmatpush.bf16.msra.mxu0 0
    %945 = vmatpush.bf16.msra.mxu0 0
    %946 = vmatpush.bf16.msra.mxu0 0
    %947 = vmatpush.bf16.msra.mxu0 %v900
    %948 = vmatmul.bf16.gmra.mxu0 %v890
    %v949 = vpop.f32.mrf.mxu0
    %v950 = vadd.f32 %v859, %v949
    %v951 = vpop.f32.mrf.mxu0
    %952 = vdwg.mxu0
    %953 = vmatpush.bf16.msra.mxu0 0
    %954 = vmatpush.bf16.msra.mxu0 0
    %955 = vmatpush.bf16.msra.mxu0 0
    %956 = vmatpush.bf16.msra.mxu0 0
    %957 = vmatpush.bf16.msra.mxu0 0
    %958 = vmatpush.bf16.msra.mxu0 0
    %959 = vmatpush.bf16.msra.mxu0 0
    %960 = vmatpush.bf16.msra.mxu0 %v903
    %961 = vmatmul.bf16.gmra.mxu0 %v890
    %v962 = vpop.f32.mrf.mxu0
    %v963 = vadd.f32 %v860, %v962
    %v964 = vpop.f32.mrf.mxu0
    %965 = vdwg.mxu0
    %966 = vmatpush.bf16.msra.mxu0 0
    %967 = vmatpush.bf16.msra.mxu0 0
    %968 = vmatpush.bf16.msra.mxu0 0
    %969 = vmatpush.bf16.msra.mxu0 0
    %970 = vmatpush.bf16.msra.mxu0 0
    %971 = vmatpush.bf16.msra.mxu0 0
    %972 = vmatpush.bf16.msra.mxu0 0
    %973 = vmatpush.bf16.msra.mxu0 %v906
    %974 = vmatmul.bf16.gmra.mxu0 %v890
    %v975 = vpop.f32.mrf.mxu0
    %v976 = vadd.f32 %v861, %v975
    %v977 = vpop.f32.mrf.mxu0
    %978 = vdwg.mxu0
    %979 = vmatpush.bf16.msra.mxu0 0
    %980 = vmatpush.bf16.msra.mxu0 0
    %981 = vmatpush.bf16.msra.mxu0 0
    %982 = vmatpush.bf16.msra.mxu0 0
    %983 = vmatpush.bf16.msra.mxu0 0
    %984 = vmatpush.bf16.msra.mxu0 0
    %985 = vmatpush.bf16.msra.mxu0 0
    %986 = vmatpush.bf16.msra.mxu0 %v909
    %987 = vmatmul.bf16.gmra.mxu0 %v890
    %v988 = vpop.f32.mrf.mxu0
    %v989 = vadd.f32 %v862, %v988
    %v990 = vpop.f32.mrf.mxu0
    %991 = vdwg.mxu0
    %992 = vmatpush.bf16.msra.mxu0 0
    %993 = vmatpush.bf16.msra.mxu0 0
    %994 = vmatpush.bf16.msra.mxu0 0
    %995 = vmatpush.bf16.msra.mxu0 0
    %996 = vmatpush.bf16.msra.mxu0 0
    %997 = vmatpush.bf16.msra.mxu0 0
    %998 = vmatpush.bf16.msra.mxu0 0
    %999 = vmatpush.bf16.msra.mxu0 %v912
    %1000 = vmatmul.bf16.gmra.mxu0 %v890
    %v1001 = vpop.f32.mrf.mxu0
    %v1002 = vadd.f32 %v863, %v1001
    %v1003 = vpop.f32.mrf.mxu0
    %1004 = vdwg.mxu0
    %v1005 = vmax.f32 %v924, 0.0
    %v1006 = vmax.f32 %v937, 0.0
    %v1007 = vmax.f32 %v950, 0.0
    %v1008 = vmax.f32 %v963, 0.0
    %v1009 = vmax.f32 %v976, 0.0
    %v1010 = vmax.f32 %v989, 0.0
    %v1011 = vmax.f32 %v1002, 0.0
    %v1012 = vpack.c.bf16 %v1005, %v1005
    %v1013 = vpack.c.bf16 %v1006, %v1006
    %v1014 = vpack.c.bf16 %v1007, %v1007
    %v1015 = vpack.c.bf16 %v1008, %v1008
    %v1016 = vpack.c.bf16 %v1009, %v1009
    %v1017 = vpack.c.bf16 %v1010, %v1010
    %v1018 = vpack.c.bf16 %v1011, %v1011
    %v1019 = vld [vmem:[#allocation3] sm:$0xff]
    %v1020 = vld [vmem:[#allocation3 + $0x8] sm:$0xff]
    %v1021 = vld [vmem:[#allocation3 + $0x10] sm:$0xff]
    %v1022 = vld [vmem:[#allocation3 + $0x18] sm:$0xff]
    %v1023 = vld [vmem:[#allocation3 + $0x20] sm:$0xff]
    %v1024 = vld [vmem:[#allocation3 + $0x28] sm:$0xff]
    %v1025 = vld [vmem:[#allocation3 + $0x30] sm:$0xff]
    %v1026 = vld [vmem:[#allocation3 + $0x38] sm:$0xff]
    %v1027 = vld [vmem:[#allocation3 + $0x40] sm:$0xff]
    %v1028 = vld [vmem:[#allocation3 + $0x48] sm:$0xff]
    %v1029 = vld [vmem:[#allocation3 + $0x50] sm:$0xff]
    %v1030 = vld [vmem:[#allocation3 + $0x58] sm:$0xff]
    %v1031 = vld [vmem:[#allocation3 + $0x60] sm:$0xff]
    %v1032 = vld [vmem:[#allocation3 + $0x68] sm:$0xff]
    %v1033 = vld [vmem:[#allocation3 + $0x70] sm:$0xff]
    %v1034 = vld [vmem:[#allocation3 + $0x78] sm:$0xff]
    %v1035 = vld [vmem:[#allocation3 + $0x80] sm:$0xff]
    %v1036 = vld [vmem:[#allocation3 + $0x88] sm:$0xff]
    %v1037 = vld [vmem:[#allocation3 + $0x90] sm:$0xff]
    %v1038 = vld [vmem:[#allocation3 + $0x98] sm:$0xff]
    %v1039 = vld [vmem:[#allocation3 + $0xa0] sm:$0xff]
    %v1040 = vld [vmem:[#allocation3 + $0xa8] sm:$0xff]
    %v1041 = vld [vmem:[#allocation3 + $0xb0] sm:$0xff]
    %v1042 = vld [vmem:[#allocation3 + $0xb8] sm:$0xff]
    %v1043 = vld [vmem:[#allocation3 + $0xc0] sm:$0xff]
    %v1044 = vld [vmem:[#allocation3 + $0xc8] sm:$0xff]
    %v1045 = vld [vmem:[#allocation3 + $0xd0] sm:$0xff]
    %v1046 = vld [vmem:[#allocation3 + $0xd8] sm:$0xff]
    %v1047 = vld [vmem:[#allocation3 + $0xe0] sm:$0xff]
    %v1048 = vld [vmem:[#allocation3 + $0xe8] sm:$0xff]
    %v1049 = vld [vmem:[#allocation3 + $0xf0] sm:$0xff]
    %v1050 = vld [vmem:[#allocation3 + $0xf8] sm:$0xff]
    %v1051 = vld [vmem:[#allocation3 + $0x100] sm:$0xff]
    %v1052 = vld [vmem:[#allocation3 + $0x108] sm:$0xff]
    %v1053 = vld [vmem:[#allocation3 + $0x110] sm:$0xff]
    %v1054 = vld [vmem:[#allocation3 + $0x118] sm:$0xff]
    %v1055 = vld [vmem:[#allocation3 + $0x120] sm:$0xff]
    %v1056 = vld [vmem:[#allocation3 + $0x128] sm:$0xff]
    %v1057 = vld [vmem:[#allocation3 + $0x130] sm:$0xff]
    %v1058 = vld [vmem:[#allocation3 + $0x138] sm:$0xff]
    %v1059 = vld [vmem:[#allocation3 + $0x140] sm:$0xff]
    %v1060 = vld [vmem:[#allocation3 + $0x148] sm:$0xff]
    %v1061 = vld [vmem:[#allocation3 + $0x150] sm:$0xff]
    %v1062 = vld [vmem:[#allocation3 + $0x158] sm:$0xff]
    %v1063 = vld [vmem:[#allocation3 + $0x160] sm:$0xff]
    %v1064 = vld [vmem:[#allocation3 + $0x168] sm:$0xff]
    %v1065 = vld [vmem:[#allocation3 + $0x170] sm:$0xff]
    %v1066 = vld [vmem:[#allocation3 + $0x178] sm:$0xff]
    %v1067 = vld [vmem:[#allocation3 + $0x180] sm:$0xff]
    %v1068 = vld [vmem:[#allocation3 + $0x188] sm:$0xff]
    %v1069 = vld [vmem:[#allocation3 + $0x190] sm:$0xff]
    %v1070 = vld [vmem:[#allocation3 + $0x198] sm:$0xff]
    %v1071 = vld [vmem:[#allocation3 + $0x1a0] sm:$0xff]
    %v1072 = vld [vmem:[#allocation3 + $0x1a8] sm:$0xff]
    %v1073 = vld [vmem:[#allocation3 + $0x1b0] sm:$0xff]
    %v1074 = vld [vmem:[#allocation3 + $0x1b8] sm:$0xff]
    %v1075 = vld [vmem:[#allocation3 + $0x1c0] sm:$0xff]
    %v1076 = vld [vmem:[#allocation3 + $0x1c8] sm:$0xff]
    %v1077 = vld [vmem:[#allocation3 + $0x1d0] sm:$0xff]
    %v1078 = vld [vmem:[#allocation3 + $0x1d8] sm:$0xff]
    %v1079 = vld [vmem:[#allocation3 + $0x1e0] sm:$0xff]
    %v1080 = vld [vmem:[#allocation3 + $0x1e8] sm:$0xff]
    %v1081 = vld [vmem:[#allocation3 + $0x1f0] sm:$0xff]
    %v1082 = vld [vmem:[#allocation3 + $0x1f8] sm:$0xff]
    %v1083 = vld [vmem:[#allocation3 + $0x200] sm:$0xff]
    %v1084 = vld [vmem:[#allocation3 + $0x208] sm:$0xff]
    %v1085 = vld [vmem:[#allocation3 + $0x210] sm:$0xff]
    %v1086 = vld [vmem:[#allocation3 + $0x218] sm:$0xff]
    %v1087 = vld [vmem:[#allocation3 + $0x220] sm:$0xff]
    %v1088 = vld [vmem:[#allocation3 + $0x228] sm:$0xff]
    %v1089 = vld [vmem:[#allocation3 + $0x230] sm:$0xff]
    %v1090 = vld [vmem:[#allocation3 + $0x238] sm:$0xff]
    %v1091 = vld [vmem:[#allocation3 + $0x240] sm:$0xff]
    %v1092 = vld [vmem:[#allocation3 + $0x248] sm:$0xff]
    %v1093 = vld [vmem:[#allocation3 + $0x250] sm:$0xff]
    %v1094 = vld [vmem:[#allocation3 + $0x258] sm:$0xff]
    %v1095 = vld [vmem:[#allocation3 + $0x260] sm:$0xff]
    %v1096 = vld [vmem:[#allocation3 + $0x268] sm:$0xff]
    %v1097 = vld [vmem:[#allocation3 + $0x270] sm:$0xff]
    %v1098 = vld [vmem:[#allocation3 + $0x278] sm:$0xff]
    %v1099 = vld [vmem:[#allocation3 + $0x280] sm:$0xff]
    %v1100 = vld [vmem:[#allocation3 + $0x288] sm:$0xff]
    %v1101 = vld [vmem:[#allocation3 + $0x290] sm:$0xff]
    %v1102 = vld [vmem:[#allocation3 + $0x298] sm:$0xff]
    %v1103 = vld [vmem:[#allocation3 + $0x2a0] sm:$0xff]
    %v1104 = vld [vmem:[#allocation3 + $0x2a8] sm:$0xff]
    %v1105 = vld [vmem:[#allocation3 + $0x2b0] sm:$0xff]
    %v1106 = vld [vmem:[#allocation3 + $0x2b8] sm:$0xff]
    %v1107 = vld [vmem:[#allocation3 + $0x2c0] sm:$0xff]
    %v1108 = vld [vmem:[#allocation3 + $0x2c8] sm:$0xff]
    %v1109 = vld [vmem:[#allocation3 + $0x2d0] sm:$0xff]
    %v1110 = vld [vmem:[#allocation3 + $0x2d8] sm:$0xff]
    %v1111 = vld [vmem:[#allocation3 + $0x2e0] sm:$0xff]
    %v1112 = vld [vmem:[#allocation3 + $0x2e8] sm:$0xff]
    %v1113 = vld [vmem:[#allocation3 + $0x2f0] sm:$0xff]
    %v1114 = vld [vmem:[#allocation3 + $0x2f8] sm:$0xff]
    %v1115 = vld [vmem:[#allocation3 + $0x300] sm:$0xff]
    %v1116 = vld [vmem:[#allocation3 + $0x308] sm:$0xff]
    %v1117 = vld [vmem:[#allocation3 + $0x310] sm:$0xff]
    %v1118 = vld [vmem:[#allocation3 + $0x318] sm:$0xff]
    %v1119 = vld [vmem:[#allocation3 + $0x320] sm:$0xff]
    %v1120 = vld [vmem:[#allocation3 + $0x328] sm:$0xff]
    %v1121 = vld [vmem:[#allocation3 + $0x330] sm:$0xff]
    %v1122 = vld [vmem:[#allocation3 + $0x338] sm:$0xff]
    %v1123 = vld [vmem:[#allocation3 + $0x340] sm:$0xff]
    %v1124 = vld [vmem:[#allocation3 + $0x348] sm:$0xff]
    %v1125 = vld [vmem:[#allocation3 + $0x350] sm:$0xff]
    %v1126 = vld [vmem:[#allocation3 + $0x358] sm:$0xff]
    %v1127 = vld [vmem:[#allocation3 + $0x360] sm:$0xff]
    %v1128 = vld [vmem:[#allocation3 + $0x368] sm:$0xff]
    %v1129 = vld [vmem:[#allocation3 + $0x370] sm:$0xff]
    %v1130 = vld [vmem:[#allocation3 + $0x378] sm:$0xff]
    %s1131 = scalar_lea.vmem %s2, 59
    %v1132 = vld [vmem:[%s1131] ss:$8 sm:$0x3]
    %v1134 = vperm.slane %v1132, 0
    %v1135 = vperm.slane %v1132, 1
    %v1250 = vunpack.c.l.b16 %v1019
    %v1251 = vunpack.c.h.b16 %v1019
    %v1252 = vunpack.c.l.b16 %v1020
    %v1253 = vunpack.c.h.b16 %v1020
    %v1254 = vunpack.c.l.b16 %v1021
    %v1255 = vunpack.c.h.b16 %v1021
    %v1256 = vunpack.c.l.b16 %v1022
    %v1257 = vunpack.c.h.b16 %v1022
    %v1258 = vunpack.c.l.b16 %v1023
    %v1259 = vunpack.c.h.b16 %v1023
    %v1260 = vunpack.c.l.b16 %v1024
    %v1261 = vunpack.c.h.b16 %v1024
    %v1262 = vunpack.c.l.b16 %v1025
    %v1263 = vunpack.c.h.b16 %v1025
    %v1264 = vunpack.c.l.b16 %v1026
    %v1265 = vunpack.c.h.b16 %v1026
    %v1266 = vunpack.c.l.b16 %v1027
    %v1267 = vunpack.c.h.b16 %v1027
    %v1268 = vunpack.c.l.b16 %v1028
    %v1269 = vunpack.c.h.b16 %v1028
    %v1270 = vunpack.c.l.b16 %v1029
    %v1271 = vunpack.c.h.b16 %v1029
    %v1272 = vunpack.c.l.b16 %v1030
    %v1273 = vunpack.c.h.b16 %v1030
    %v1274 = vunpack.c.l.b16 %v1031
    %v1275 = vunpack.c.h.b16 %v1031
    %v1276 = vunpack.c.l.b16 %v1032
    %v1277 = vunpack.c.h.b16 %v1032
    %v1278 = vunpack.c.l.b16 %v1033
    %v1279 = vunpack.c.h.b16 %v1033
    %v1280 = vunpack.c.l.b16 %v1034
    %v1281 = vunpack.c.h.b16 %v1034
    %v1282 = vunpack.c.l.b16 %v1035
    %v1283 = vunpack.c.h.b16 %v1035
    %v1284 = vunpack.c.l.b16 %v1036
    %v1285 = vunpack.c.h.b16 %v1036
    %v1286 = vunpack.c.l.b16 %v1037
    %v1287 = vunpack.c.h.b16 %v1037
    %v1288 = vunpack.c.l.b16 %v1038
    %v1289 = vunpack.c.h.b16 %v1038
    %v1290 = vunpack.c.l.b16 %v1039
    %v1291 = vunpack.c.h.b16 %v1039
    %v1292 = vunpack.c.l.b16 %v1040
    %v1293 = vunpack.c.h.b16 %v1040
    %v1294 = vunpack.c.l.b16 %v1041
    %v1295 = vunpack.c.h.b16 %v1041
    %v1296 = vunpack.c.l.b16 %v1042
    %v1297 = vunpack.c.h.b16 %v1042
    %v1298 = vunpack.c.l.b16 %v1043
    %v1299 = vunpack.c.h.b16 %v1043
    %v1300 = vunpack.c.l.b16 %v1044
    %v1301 = vunpack.c.h.b16 %v1044
    %v1302 = vunpack.c.l.b16 %v1045
    %v1303 = vunpack.c.h.b16 %v1045
    %v1304 = vunpack.c.l.b16 %v1046
    %v1305 = vunpack.c.h.b16 %v1046
    %v1306 = vunpack.c.l.b16 %v1047
    %v1307 = vunpack.c.h.b16 %v1047
    %v1308 = vunpack.c.l.b16 %v1048
    %v1309 = vunpack.c.h.b16 %v1048
    %v1310 = vunpack.c.l.b16 %v1049
    %v1311 = vunpack.c.h.b16 %v1049
    %v1312 = vunpack.c.l.b16 %v1050
    %v1313 = vunpack.c.h.b16 %v1050
    %v1314 = vunpack.c.l.b16 %v1051
    %v1315 = vunpack.c.h.b16 %v1051
    %v1316 = vunpack.c.l.b16 %v1052
    %v1317 = vunpack.c.h.b16 %v1052
    %v1318 = vunpack.c.l.b16 %v1053
    %v1319 = vunpack.c.h.b16 %v1053
    %v1320 = vunpack.c.l.b16 %v1054
    %v1321 = vunpack.c.h.b16 %v1054
    %v1322 = vunpack.c.l.b16 %v1055
    %v1323 = vunpack.c.h.b16 %v1055
    %v1324 = vunpack.c.l.b16 %v1056
    %v1325 = vunpack.c.h.b16 %v1056
    %v1326 = vunpack.c.l.b16 %v1057
    %v1327 = vunpack.c.h.b16 %v1057
    %v1328 = vunpack.c.l.b16 %v1058
    %v1329 = vunpack.c.h.b16 %v1058
    %v1330 = vunpack.c.l.b16 %v1059
    %v1331 = vunpack.c.h.b16 %v1059
    %v1332 = vunpack.c.l.b16 %v1060
    %v1333 = vunpack.c.h.b16 %v1060
    %v1334 = vunpack.c.l.b16 %v1061
    %v1335 = vunpack.c.h.b16 %v1061
    %v1336 = vunpack.c.l.b16 %v1062
    %v1337 = vunpack.c.h.b16 %v1062
    %v1338 = vunpack.c.l.b16 %v1063
    %v1339 = vunpack.c.h.b16 %v1063
    %v1340 = vunpack.c.l.b16 %v1064
    %v1341 = vunpack.c.h.b16 %v1064
    %v1342 = vunpack.c.l.b16 %v1065
    %v1343 = vunpack.c.h.b16 %v1065
    %v1344 = vunpack.c.l.b16 %v1066
    %v1345 = vunpack.c.h.b16 %v1066
    %v1346 = vunpack.c.l.b16 %v1067
    %v1347 = vunpack.c.h.b16 %v1067
    %v1348 = vunpack.c.l.b16 %v1068
    %v1349 = vunpack.c.h.b16 %v1068
    %v1350 = vunpack.c.l.b16 %v1069
    %v1351 = vunpack.c.h.b16 %v1069
    %v1352 = vunpack.c.l.b16 %v1070
    %v1353 = vunpack.c.h.b16 %v1070
    %v1354 = vunpack.c.l.b16 %v1071
    %v1355 = vunpack.c.h.b16 %v1071
    %v1356 = vunpack.c.l.b16 %v1072
    %v1357 = vunpack.c.h.b16 %v1072
    %v1358 = vunpack.c.l.b16 %v1073
    %v1359 = vunpack.c.h.b16 %v1073
    %v1360 = vunpack.c.l.b16 %v1074
    %v1361 = vunpack.c.h.b16 %v1074
    %v1362 = vunpack.c.l.b16 %v1075
    %v1363 = vunpack.c.h.b16 %v1075
    %v1364 = vunpack.c.l.b16 %v1076
    %v1365 = vunpack.c.h.b16 %v1076
    %v1366 = vunpack.c.l.b16 %v1077
    %v1367 = vunpack.c.h.b16 %v1077
    %v1368 = vunpack.c.l.b16 %v1078
    %v1369 = vunpack.c.h.b16 %v1078
    %v1370 = vunpack.c.l.b16 %v1079
    %v1371 = vunpack.c.h.b16 %v1079
    %v1372 = vunpack.c.l.b16 %v1080
    %v1373 = vunpack.c.h.b16 %v1080
    %v1374 = vunpack.c.l.b16 %v1081
    %v1375 = vunpack.c.h.b16 %v1081
    %v1376 = vunpack.c.l.b16 %v1082
    %v1377 = vunpack.c.h.b16 %v1082
    %v1378 = vunpack.c.l.b16 %v1083
    %v1379 = vunpack.c.h.b16 %v1083
    %v1380 = vunpack.c.l.b16 %v1084
    %v1381 = vunpack.c.h.b16 %v1084
    %v1382 = vunpack.c.l.b16 %v1085
    %v1383 = vunpack.c.h.b16 %v1085
    %v1384 = vunpack.c.l.b16 %v1086
    %v1385 = vunpack.c.h.b16 %v1086
    %v1386 = vunpack.c.l.b16 %v1087
    %v1387 = vunpack.c.h.b16 %v1087
    %v1388 = vunpack.c.l.b16 %v1088
    %v1389 = vunpack.c.h.b16 %v1088
    %v1390 = vunpack.c.l.b16 %v1089
    %v1391 = vunpack.c.h.b16 %v1089
    %v1392 = vunpack.c.l.b16 %v1090
    %v1393 = vunpack.c.h.b16 %v1090
    %v1394 = vunpack.c.l.b16 %v1091
    %v1395 = vunpack.c.h.b16 %v1091
    %v1396 = vunpack.c.l.b16 %v1092
    %v1397 = vunpack.c.h.b16 %v1092
    %v1398 = vunpack.c.l.b16 %v1093
    %v1399 = vunpack.c.h.b16 %v1093
    %v1400 = vunpack.c.l.b16 %v1094
    %v1401 = vunpack.c.h.b16 %v1094
    %v1402 = vunpack.c.l.b16 %v1095
    %v1403 = vunpack.c.h.b16 %v1095
    %v1404 = vunpack.c.l.b16 %v1096
    %v1405 = vunpack.c.h.b16 %v1096
    %v1406 = vunpack.c.l.b16 %v1097
    %v1407 = vunpack.c.h.b16 %v1097
    %v1408 = vunpack.c.l.b16 %v1098
    %v1409 = vunpack.c.h.b16 %v1098
    %v1410 = vunpack.c.l.b16 %v1099
    %v1411 = vunpack.c.h.b16 %v1099
    %v1412 = vunpack.c.l.b16 %v1100
    %v1413 = vunpack.c.h.b16 %v1100
    %v1414 = vunpack.c.l.b16 %v1101
    %v1415 = vunpack.c.h.b16 %v1101
    %v1416 = vunpack.c.l.b16 %v1102
    %v1417 = vunpack.c.h.b16 %v1102
    %v1418 = vunpack.c.l.b16 %v1103
    %v1419 = vunpack.c.h.b16 %v1103
    %v1420 = vunpack.c.l.b16 %v1104
    %v1421 = vunpack.c.h.b16 %v1104
    %v1422 = vunpack.c.l.b16 %v1105
    %v1423 = vunpack.c.h.b16 %v1105
    %v1424 = vunpack.c.l.b16 %v1106
    %v1425 = vunpack.c.h.b16 %v1106
    %v1426 = vunpack.c.l.b16 %v1107
    %v1427 = vunpack.c.h.b16 %v1107
    %v1428 = vunpack.c.l.b16 %v1108
    %v1429 = vunpack.c.h.b16 %v1108
    %v1430 = vunpack.c.l.b16 %v1109
    %v1431 = vunpack.c.h.b16 %v1109
    %v1432 = vunpack.c.l.b16 %v1110
    %v1433 = vunpack.c.h.b16 %v1110
    %v1434 = vunpack.c.l.b16 %v1111
    %v1435 = vunpack.c.h.b16 %v1111
    %v1436 = vunpack.c.l.b16 %v1112
    %v1437 = vunpack.c.h.b16 %v1112
    %v1438 = vunpack.c.l.b16 %v1113
    %v1439 = vunpack.c.h.b16 %v1113
    %v1440 = vunpack.c.l.b16 %v1114
    %v1441 = vunpack.c.h.b16 %v1114
    %v1442 = vunpack.c.l.b16 %v1115
    %v1443 = vunpack.c.h.b16 %v1115
    %v1444 = vunpack.c.l.b16 %v1116
    %v1445 = vunpack.c.h.b16 %v1116
    %v1446 = vunpack.c.l.b16 %v1117
    %v1447 = vunpack.c.h.b16 %v1117
    %v1448 = vunpack.c.l.b16 %v1118
    %v1449 = vunpack.c.h.b16 %v1118
    %v1450 = vunpack.c.l.b16 %v1119
    %v1451 = vunpack.c.h.b16 %v1119
    %v1452 = vunpack.c.l.b16 %v1120
    %v1453 = vunpack.c.h.b16 %v1120
    %v1454 = vunpack.c.l.b16 %v1121
    %v1455 = vunpack.c.h.b16 %v1121
    %v1456 = vunpack.c.l.b16 %v1122
    %v1457 = vunpack.c.h.b16 %v1122
    %v1458 = vunpack.c.l.b16 %v1123
    %v1459 = vunpack.c.h.b16 %v1123
    %v1460 = vunpack.c.l.b16 %v1124
    %v1461 = vunpack.c.h.b16 %v1124
    %v1462 = vunpack.c.l.b16 %v1125
    %v1463 = vunpack.c.h.b16 %v1125
    %v1464 = vunpack.c.l.b16 %v1126
    %v1465 = vunpack.c.h.b16 %v1126
    %v1466 = vunpack.c.l.b16 %v1127
    %v1467 = vunpack.c.h.b16 %v1127
    %v1468 = vunpack.c.l.b16 %v1128
    %v1469 = vunpack.c.h.b16 %v1128
    %v1470 = vunpack.c.l.b16 %v1129
    %v1471 = vunpack.c.h.b16 %v1129
    %v1472 = vunpack.c.l.b16 %v1130
    %v1473 = vunpack.c.h.b16 %v1130
    %v1474 = vpack.c.b16 %v1252, %v1250
    %v1475 = vpack.c.b16 %v1253, %v1251
    %v1476 = vpack.c.b16 %v1256, %v1254
    %v1477 = vpack.c.b16 %v1257, %v1255
    %v1478 = vpack.c.b16 %v1260, %v1258
    %v1479 = vpack.c.b16 %v1261, %v1259
    %v1480 = vpack.c.b16 %v1264, %v1262
    %v1481 = vpack.c.b16 %v1265, %v1263
    %v1482 = vpack.c.b16 %v1268, %v1266
    %v1483 = vpack.c.b16 %v1269, %v1267
    %v1484 = vpack.c.b16 %v1272, %v1270
    %v1485 = vpack.c.b16 %v1273, %v1271
    %v1486 = vpack.c.b16 %v1276, %v1274
    %v1487 = vpack.c.b16 %v1277, %v1275
    %v1488 = vpack.c.b16 %v1280, %v1278
    %v1489 = vpack.c.b16 %v1281, %v1279
    %v1490 = vpack.c.b16 %v1284, %v1282
    %v1491 = vpack.c.b16 %v1285, %v1283
    %v1492 = vpack.c.b16 %v1288, %v1286
    %v1493 = vpack.c.b16 %v1289, %v1287
    %v1494 = vpack.c.b16 %v1292, %v1290
    %v1495 = vpack.c.b16 %v1293, %v1291
    %v1496 = vpack.c.b16 %v1296, %v1294
    %v1497 = vpack.c.b16 %v1297, %v1295
    %v1498 = vpack.c.b16 %v1300, %v1298
    %v1499 = vpack.c.b16 %v1301, %v1299
    %v1500 = vpack.c.b16 %v1304, %v1302
    %v1501 = vpack.c.b16 %v1305, %v1303
    %v1502 = vpack.c.b16 %v1308, %v1306
    %v1503 = vpack.c.b16 %v1309, %v1307
    %v1504 = vpack.c.b16 %v1312, %v1310
    %v1505 = vpack.c.b16 %v1313, %v1311
    %v1506 = vpack.c.b16 %v1316, %v1314
    %v1507 = vpack.c.b16 %v1317, %v1315
    %v1508 = vpack.c.b16 %v1320, %v1318
    %v1509 = vpack.c.b16 %v1321, %v1319
    %v1510 = vpack.c.b16 %v1324, %v1322
    %v1511 = vpack.c.b16 %v1325, %v1323
    %v1512 = vpack.c.b16 %v1328, %v1326
    %v1513 = vpack.c.b16 %v1329, %v1327
    %v1514 = vpack.c.b16 %v1332, %v1330
    %v1515 = vpack.c.b16 %v1333, %v1331
    %v1516 = vpack.c.b16 %v1336, %v1334
    %v1517 = vpack.c.b16 %v1337, %v1335
    %v1518 = vpack.c.b16 %v1340, %v1338
    %v1519 = vpack.c.b16 %v1341, %v1339
    %v1520 = vpack.c.b16 %v1344, %v1342
    %v1521 = vpack.c.b16 %v1345, %v1343
    %v1522 = vpack.c.b16 %v1348, %v1346
    %v1523 = vpack.c.b16 %v1349, %v1347
    %v1524 = vpack.c.b16 %v1352, %v1350
    %v1525 = vpack.c.b16 %v1353, %v1351
    %v1526 = vpack.c.b16 %v1356, %v1354
    %v1527 = vpack.c.b16 %v1357, %v1355
    %v1528 = vpack.c.b16 %v1360, %v1358
    %v1529 = vpack.c.b16 %v1361, %v1359
    %v1530 = vpack.c.b16 %v1364, %v1362
    %v1531 = vpack.c.b16 %v1365, %v1363
    %v1532 = vpack.c.b16 %v1368, %v1366
    %v1533 = vpack.c.b16 %v1369, %v1367
    %v1534 = vpack.c.b16 %v1372, %v1370
    %v1535 = vpack.c.b16 %v1373, %v1371
    %v1536 = vpack.c.b16 %v1376, %v1374
    %v1537 = vpack.c.b16 %v1377, %v1375
    %v1538 = vpack.c.b16 %v1380, %v1378
    %v1539 = vpack.c.b16 %v1381, %v1379
    %v1540 = vpack.c.b16 %v1384, %v1382
    %v1541 = vpack.c.b16 %v1385, %v1383
    %v1542 = vpack.c.b16 %v1388, %v1386
    %v1543 = vpack.c.b16 %v1389, %v1387
    %v1544 = vpack.c.b16 %v1392, %v1390
    %v1545 = vpack.c.b16 %v1393, %v1391
    %v1546 = vpack.c.b16 %v1396, %v1394
    %v1547 = vpack.c.b16 %v1397, %v1395
    %v1548 = vpack.c.b16 %v1400, %v1398
    %v1549 = vpack.c.b16 %v1401, %v1399
    %v1550 = vpack.c.b16 %v1404, %v1402
    %v1551 = vpack.c.b16 %v1405, %v1403
    %v1552 = vpack.c.b16 %v1408, %v1406
    %v1553 = vpack.c.b16 %v1409, %v1407
    %v1554 = vpack.c.b16 %v1412, %v1410
    %v1555 = vpack.c.b16 %v1413, %v1411
    %v1556 = vpack.c.b16 %v1416, %v1414
    %v1557 = vpack.c.b16 %v1417, %v1415
    %v1558 = vpack.c.b16 %v1420, %v1418
    %v1559 = vpack.c.b16 %v1421, %v1419
    %v1560 = vpack.c.b16 %v1424, %v1422
    %v1561 = vpack.c.b16 %v1425, %v1423
    %v1562 = vpack.c.b16 %v1428, %v1426
    %v1563 = vpack.c.b16 %v1429, %v1427
    %v1564 = vpack.c.b16 %v1432, %v1430
    %v1565 = vpack.c.b16 %v1433, %v1431
    %v1566 = vpack.c.b16 %v1436, %v1434
    %v1567 = vpack.c.b16 %v1437, %v1435
    %v1568 = vpack.c.b16 %v1440, %v1438
    %v1569 = vpack.c.b16 %v1441, %v1439
    %v1570 = vpack.c.b16 %v1444, %v1442
    %v1571 = vpack.c.b16 %v1445, %v1443
    %v1572 = vpack.c.b16 %v1448, %v1446
    %v1573 = vpack.c.b16 %v1449, %v1447
    %v1574 = vpack.c.b16 %v1452, %v1450
    %v1575 = vpack.c.b16 %v1453, %v1451
    %v1576 = vpack.c.b16 %v1456, %v1454
    %v1577 = vpack.c.b16 %v1457, %v1455
    %v1578 = vpack.c.b16 %v1460, %v1458
    %v1579 = vpack.c.b16 %v1461, %v1459
    %v1580 = vpack.c.b16 %v1464, %v1462
    %v1581 = vpack.c.b16 %v1465, %v1463
    %v1582 = vpack.c.b16 %v1468, %v1466
    %v1583 = vpack.c.b16 %v1469, %v1467
    %v1584 = vpack.c.b16 %v1472, %v1470
    %v1585 = vpack.c.b16 %v1473, %v1471
    %1698 = vmatpush.bf16.msra.mxu0 %v1488
    %1699 = vmatpush.bf16.msra.mxu0 %v1486
    %1700 = vmatpush.bf16.msra.mxu0 %v1484
    %1701 = vmatpush.bf16.msra.mxu0 %v1482
    %1702 = vmatpush.bf16.msra.mxu0 %v1480
    %1703 = vmatpush.bf16.msra.mxu0 %v1478
    %1704 = vmatpush.bf16.msra.mxu0 %v1476
    %1705 = vmatpush.bf16.msra.mxu0 %v1474
    %1706 = vmatmul.bf16.gmra.mxu0 %v1012
    %v1707 = vpop.f32.mrf.mxu0
    %v1708 = vadd.f32 %v1134, %v1707
    %v1709 = vpop.f32.mrf.mxu0
    %1710 = vdwg.mxu0
    %1711 = vmatpush.bf16.msra.mxu0 %v1504
    %1712 = vmatpush.bf16.msra.mxu0 %v1502
    %1713 = vmatpush.bf16.msra.mxu0 %v1500
    %1714 = vmatpush.bf16.msra.mxu0 %v1498
    %1715 = vmatpush.bf16.msra.mxu0 %v1496
    %1716 = vmatpush.bf16.msra.mxu0 %v1494
    %1717 = vmatpush.bf16.msra.mxu0 %v1492
    %1718 = vmatpush.bf16.msra.mxu0 %v1490
    %1719 = vmatmul.bf16.gmra.mxu0 %v1013
    %v1720 = vpop.f32.mrf.mxu0
    %v1721 = vadd.f32 %v1708, %v1720
    %v1722 = vpop.f32.mrf.mxu0
    %1723 = vdwg.mxu0
    %1724 = vmatpush.bf16.msra.mxu0 %v1520
    %1725 = vmatpush.bf16.msra.mxu0 %v1518
    %1726 = vmatpush.bf16.msra.mxu0 %v1516
    %1727 = vmatpush.bf16.msra.mxu0 %v1514
    %1728 = vmatpush.bf16.msra.mxu0 %v1512
    %1729 = vmatpush.bf16.msra.mxu0 %v1510
    %1730 = vmatpush.bf16.msra.mxu0 %v1508
    %1731 = vmatpush.bf16.msra.mxu0 %v1506
    %1732 = vmatmul.bf16.gmra.mxu0 %v1014
    %v1733 = vpop.f32.mrf.mxu0
    %v1734 = vadd.f32 %v1721, %v1733
    %v1735 = vpop.f32.mrf.mxu0
    %1736 = vdwg.mxu0
    %1737 = vmatpush.bf16.msra.mxu0 %v1536
    %1738 = vmatpush.bf16.msra.mxu0 %v1534
    %1739 = vmatpush.bf16.msra.mxu0 %v1532
    %1740 = vmatpush.bf16.msra.mxu0 %v1530
    %1741 = vmatpush.bf16.msra.mxu0 %v1528
    %1742 = vmatpush.bf16.msra.mxu0 %v1526
    %1743 = vmatpush.bf16.msra.mxu0 %v1524
    %1744 = vmatpush.bf16.msra.mxu0 %v1522
    %1745 = vmatmul.bf16.gmra.mxu0 %v1015
    %v1746 = vpop.f32.mrf.mxu0
    %v1747 = vadd.f32 %v1734, %v1746
    %v1748 = vpop.f32.mrf.mxu0
    %1749 = vdwg.mxu0
    %1750 = vmatpush.bf16.msra.mxu0 %v1552
    %1751 = vmatpush.bf16.msra.mxu0 %v1550
    %1752 = vmatpush.bf16.msra.mxu0 %v1548
    %1753 = vmatpush.bf16.msra.mxu0 %v1546
    %1754 = vmatpush.bf16.msra.mxu0 %v1544
    %1755 = vmatpush.bf16.msra.mxu0 %v1542
    %1756 = vmatpush.bf16.msra.mxu0 %v1540
    %1757 = vmatpush.bf16.msra.mxu0 %v1538
    %1758 = vmatmul.bf16.gmra.mxu0 %v1016
    %v1759 = vpop.f32.mrf.mxu0
    %v1760 = vadd.f32 %v1747, %v1759
    %v1761 = vpop.f32.mrf.mxu0
    %1762 = vdwg.mxu0
    %1763 = vmatpush.bf16.msra.mxu0 %v1568
    %1764 = vmatpush.bf16.msra.mxu0 %v1566
    %1765 = vmatpush.bf16.msra.mxu0 %v1564
    %1766 = vmatpush.bf16.msra.mxu0 %v1562
    %1767 = vmatpush.bf16.msra.mxu0 %v1560
    %1768 = vmatpush.bf16.msra.mxu0 %v1558
    %1769 = vmatpush.bf16.msra.mxu0 %v1556
    %1770 = vmatpush.bf16.msra.mxu0 %v1554
    %1771 = vmatmul.bf16.gmra.mxu0 %v1017
    %v1772 = vpop.f32.mrf.mxu0
    %v1773 = vadd.f32 %v1760, %v1772
    %v1774 = vpop.f32.mrf.mxu0
    %1775 = vdwg.mxu0
    %1776 = vmatpush.bf16.msra.mxu0 %v1584
    %1777 = vmatpush.bf16.msra.mxu0 %v1582
    %1778 = vmatpush.bf16.msra.mxu0 %v1580
    %1779 = vmatpush.bf16.msra.mxu0 %v1578
    %1780 = vmatpush.bf16.msra.mxu0 %v1576
    %1781 = vmatpush.bf16.msra.mxu0 %v1574
    %1782 = vmatpush.bf16.msra.mxu0 %v1572
    %1783 = vmatpush.bf16.msra.mxu0 %v1570
    %1784 = vmatmul.bf16.gmra.mxu0 %v1018
    %v1785 = vpop.f32.mrf.mxu0
    %v1786 = vadd.f32 %v1773, %v1785
    %v1787 = vpop.f32.mrf.mxu0
    %1788 = vdwg.mxu0
    %1789 = vmatpush.bf16.msra.mxu0 %v1489
    %1790 = vmatpush.bf16.msra.mxu0 %v1487
    %1791 = vmatpush.bf16.msra.mxu0 %v1485
    %1792 = vmatpush.bf16.msra.mxu0 %v1483
    %1793 = vmatpush.bf16.msra.mxu0 %v1481
    %1794 = vmatpush.bf16.msra.mxu0 %v1479
    %1795 = vmatpush.bf16.msra.mxu0 %v1477
    %1796 = vmatpush.bf16.msra.mxu0 %v1475
    %1797 = vmatmul.bf16.gmra.mxu0 %v1012
    %v1798 = vpop.f32.mrf.mxu0
    %v1799 = vadd.f32 %v1135, %v1798
    %v1800 = vpop.f32.mrf.mxu0
    %1801 = vdwg.mxu0
    %1802 = vmatpush.bf16.msra.mxu0 %v1505
    %1803 = vmatpush.bf16.msra.mxu0 %v1503
    %1804 = vmatpush.bf16.msra.mxu0 %v1501
    %1805 = vmatpush.bf16.msra.mxu0 %v1499
    %1806 = vmatpush.bf16.msra.mxu0 %v1497
    %1807 = vmatpush.bf16.msra.mxu0 %v1495
    %1808 = vmatpush.bf16.msra.mxu0 %v1493
    %1809 = vmatpush.bf16.msra.mxu0 %v1491
    %1810 = vmatmul.bf16.gmra.mxu0 %v1013
    %v1811 = vpop.f32.mrf.mxu0
    %v1812 = vadd.f32 %v1799, %v1811
    %v1813 = vpop.f32.mrf.mxu0
    %1814 = vdwg.mxu0
    %1815 = vmatpush.bf16.msra.mxu0 %v1521
    %1816 = vmatpush.bf16.msra.mxu0 %v1519
    %1817 = vmatpush.bf16.msra.mxu0 %v1517
    %1818 = vmatpush.bf16.msra.mxu0 %v1515
    %1819 = vmatpush.bf16.msra.mxu0 %v1513
    %1820 = vmatpush.bf16.msra.mxu0 %v1511
    %1821 = vmatpush.bf16.msra.mxu0 %v1509
    %1822 = vmatpush.bf16.msra.mxu0 %v1507
    %1823 = vmatmul.bf16.gmra.mxu0 %v1014
    %v1824 = vpop.f32.mrf.mxu0
    %v1825 = vadd.f32 %v1812, %v1824
    %v1826 = vpop.f32.mrf.mxu0
    %1827 = vdwg.mxu0
    %1828 = vmatpush.bf16.msra.mxu0 %v1537
    %1829 = vmatpush.bf16.msra.mxu0 %v1535
    %1830 = vmatpush.bf16.msra.mxu0 %v1533
    %1831 = vmatpush.bf16.msra.mxu0 %v1531
    %1832 = vmatpush.bf16.msra.mxu0 %v1529
    %1833 = vmatpush.bf16.msra.mxu0 %v1527
    %1834 = vmatpush.bf16.msra.mxu0 %v1525
    %1835 = vmatpush.bf16.msra.mxu0 %v1523
    %1836 = vmatmul.bf16.gmra.mxu0 %v1015
    %v1837 = vpop.f32.mrf.mxu0
    %v1838 = vadd.f32 %v1825, %v1837
    %v1839 = vpop.f32.mrf.mxu0
    %1840 = vdwg.mxu0
    %1841 = vmatpush.bf16.msra.mxu0 %v1553
    %1842 = vmatpush.bf16.msra.mxu0 %v1551
    %1843 = vmatpush.bf16.msra.mxu0 %v1549
    %1844 = vmatpush.bf16.msra.mxu0 %v1547
    %1845 = vmatpush.bf16.msra.mxu0 %v1545
    %1846 = vmatpush.bf16.msra.mxu0 %v1543
    %1847 = vmatpush.bf16.msra.mxu0 %v1541
    %1848 = vmatpush.bf16.msra.mxu0 %v1539
    %1849 = vmatmul.bf16.gmra.mxu0 %v1016
    %v1850 = vpop.f32.mrf.mxu0
    %v1851 = vadd.f32 %v1838, %v1850
    %v1852 = vpop.f32.mrf.mxu0
    %1853 = vdwg.mxu0
    %1854 = vmatpush.bf16.msra.mxu0 %v1569
    %1855 = vmatpush.bf16.msra.mxu0 %v1567
    %1856 = vmatpush.bf16.msra.mxu0 %v1565
    %1857 = vmatpush.bf16.msra.mxu0 %v1563
    %1858 = vmatpush.bf16.msra.mxu0 %v1561
    %1859 = vmatpush.bf16.msra.mxu0 %v1559
    %1860 = vmatpush.bf16.msra.mxu0 %v1557
    %1861 = vmatpush.bf16.msra.mxu0 %v1555
    %1862 = vmatmul.bf16.gmra.mxu0 %v1017
    %v1863 = vpop.f32.mrf.mxu0
    %v1864 = vadd.f32 %v1851, %v1863
    %v1865 = vpop.f32.mrf.mxu0
    %1866 = vdwg.mxu0
    %1867 = vmatpush.bf16.msra.mxu0 %v1585
    %1868 = vmatpush.bf16.msra.mxu0 %v1583
    %1869 = vmatpush.bf16.msra.mxu0 %v1581
    %1870 = vmatpush.bf16.msra.mxu0 %v1579
    %1871 = vmatpush.bf16.msra.mxu0 %v1577
    %1872 = vmatpush.bf16.msra.mxu0 %v1575
    %1873 = vmatpush.bf16.msra.mxu0 %v1573
    %1874 = vmatpush.bf16.msra.mxu0 %v1571
    %1875 = vmatmul.bf16.gmra.mxu0 %v1018
    %v1876 = vpop.f32.mrf.mxu0
    %v1877 = vadd.f32 %v1864, %v1876
    %v1878 = vpop.f32.mrf.mxu0
    %1879 = vdwg.mxu0
    %v1880 = vmax.f32 %v1786, 0.0
    %v1881 = vmax.f32 %v1877, 0.0
    %v1882 = vpack.c.bf16 %v1880, %v1880
    %v1883 = vpack.c.bf16 %v1881, %v1881
    %v1884 = vld [vmem:[#allocation4] sm:$0xf]
    %v1885 = vld [vmem:[#allocation4 + $0x4] sm:$0xf]
    %v1886 = vld [vmem:[#allocation4 + $0x8] sm:$0xf]
    %v1887 = vld [vmem:[#allocation4 + $0xc] sm:$0xf]
    %v1888 = vld [vmem:[#allocation4 + $0x10] sm:$0xf]
    %v1889 = vld [vmem:[#allocation4 + $0x14] sm:$0xf]
    %v1890 = vld [vmem:[#allocation4 + $0x18] sm:$0xf]
    %v1891 = vld [vmem:[#allocation4 + $0x1c] sm:$0xf]
    %v1892 = vld [vmem:[#allocation4 + $0x20] sm:$0xf]
    %v1893 = vld [vmem:[#allocation4 + $0x24] sm:$0xf]
    %v1894 = vld [vmem:[#allocation4 + $0x28] sm:$0xf]
    %v1895 = vld [vmem:[#allocation4 + $0x2c] sm:$0xf]
    %v1896 = vld [vmem:[#allocation4 + $0x30] sm:$0xf]
    %v1897 = vld [vmem:[#allocation4 + $0x34] sm:$0xf]
    %v1898 = vld [vmem:[#allocation4 + $0x38] sm:$0xf]
    %v1899 = vld [vmem:[#allocation4 + $0x3c] sm:$0xf]
    %v1900 = vld [vmem:[#allocation4 + $0x40] sm:$0xf]
    %v1901 = vld [vmem:[#allocation4 + $0x44] sm:$0xf]
    %v1902 = vld [vmem:[#allocation4 + $0x48] sm:$0xf]
    %v1903 = vld [vmem:[#allocation4 + $0x4c] sm:$0xf]
    %v1904 = vld [vmem:[#allocation4 + $0x50] sm:$0xf]
    %v1905 = vld [vmem:[#allocation4 + $0x54] sm:$0xf]
    %v1906 = vld [vmem:[#allocation4 + $0x58] sm:$0xf]
    %v1907 = vld [vmem:[#allocation4 + $0x5c] sm:$0xf]
    %v1908 = vld [vmem:[#allocation4 + $0x60] sm:$0xf]
    %v1909 = vld [vmem:[#allocation4 + $0x64] sm:$0xf]
    %v1910 = vld [vmem:[#allocation4 + $0x68] sm:$0xf]
    %v1911 = vld [vmem:[#allocation4 + $0x6c] sm:$0xf]
    %v1912 = vld [vmem:[%s2 + $0x3c] ss:$0 sm:$0xff]
    %v1941 = vunpack.c.l.b16 %v1884
    %v1942 = vunpack.c.l.b16 %v1885
    %v1943 = vunpack.c.l.b16 %v1886
    %v1944 = vunpack.c.l.b16 %v1887
    %v1945 = vunpack.c.l.b16 %v1888
    %v1946 = vunpack.c.l.b16 %v1889
    %v1947 = vunpack.c.l.b16 %v1890
    %v1948 = vunpack.c.l.b16 %v1891
    %v1949 = vunpack.c.l.b16 %v1892
    %v1950 = vunpack.c.l.b16 %v1893
    %v1951 = vunpack.c.l.b16 %v1894
    %v1952 = vunpack.c.l.b16 %v1895
    %v1953 = vunpack.c.l.b16 %v1896
    %v1954 = vunpack.c.l.b16 %v1897
    %v1955 = vunpack.c.l.b16 %v1898
    %v1956 = vunpack.c.l.b16 %v1899
    %v1957 = vunpack.c.l.b16 %v1900
    %v1958 = vunpack.c.l.b16 %v1901
    %v1959 = vunpack.c.l.b16 %v1902
    %v1960 = vunpack.c.l.b16 %v1903
    %v1961 = vunpack.c.l.b16 %v1904
    %v1962 = vunpack.c.l.b16 %v1905
    %v1963 = vunpack.c.l.b16 %v1906
    %v1964 = vunpack.c.l.b16 %v1907
    %v1965 = vunpack.c.l.b16 %v1908
    %v1966 = vunpack.c.l.b16 %v1909
    %v1967 = vunpack.c.l.b16 %v1910
    %v1968 = vunpack.c.l.b16 %v1911
    %v1969 = vpack.c.b16 %v1942, %v1941
    %v1970 = vpack.c.b16 %v1944, %v1943
    %v1971 = vpack.c.b16 %v1946, %v1945
    %v1972 = vpack.c.b16 %v1948, %v1947
    %v1973 = vpack.c.b16 %v1950, %v1949
    %v1974 = vpack.c.b16 %v1952, %v1951
    %v1975 = vpack.c.b16 %v1954, %v1953
    %v1976 = vpack.c.b16 %v1956, %v1955
    %v1977 = vpack.c.b16 %v1958, %v1957
    %v1978 = vpack.c.b16 %v1960, %v1959
    %v1979 = vpack.c.b16 %v1962, %v1961
    %v1980 = vpack.c.b16 %v1964, %v1963
    %v1981 = vpack.c.b16 %v1966, %v1965
    %v1982 = vpack.c.b16 %v1968, %v1967
    %vm1997 = vcmask 785408
    %v1999 = vsel %vm1997, %v1883, 0
    %2001 = vmatpush.bf16.msra.mxu0 %v1976
    %2002 = vmatpush.bf16.msra.mxu0 %v1975
    %2003 = vmatpush.bf16.msra.mxu0 %v1974
    %2004 = vmatpush.bf16.msra.mxu0 %v1973
    %2005 = vmatpush.bf16.msra.mxu0 %v1972
    %2006 = vmatpush.bf16.msra.mxu0 %v1971
    %2007 = vmatpush.bf16.msra.mxu0 %v1970
    %2008 = vmatpush.bf16.msra.mxu0 %v1969
    %2009 = vmatmul.bf16.gmra.mxu0 %v1882
    %v2010 = vpop.f32.mrf.mxu0
    %v2011 = vadd.f32 %v1912, %v2010
    %v2012 = vpop.f32.mrf.mxu0
    %2013 = vdwg.mxu0
    %2014 = vmatpush.bf16.msra.mxu0 0
    %2015 = vmatpush.bf16.msra.mxu0 0
    %2016 = vmatpush.bf16.msra.mxu0 %v1982
    %2017 = vmatpush.bf16.msra.mxu0 %v1981
    %2018 = vmatpush.bf16.msra.mxu0 %v1980
    %2019 = vmatpush.bf16.msra.mxu0 %v1979
    %2020 = vmatpush.bf16.msra.mxu0 %v1978
    %2021 = vmatpush.bf16.msra.mxu0 %v1977
    %2022 = vmatmul.bf16.gmra.mxu0 %v1999
    %v2023 = vpop.f32.mrf.mxu0
    %v2024 = vadd.f32 %v2011, %v2023
    %v2025 = vpop.f32.mrf.mxu0
    %2026 = vdwg.mxu0
    %2027 = vst [vmem:[%s6] sm:$0x3] %v2024
    // Predicated region
    $region74: #{transformer_mintomics.1} parent=1 // pred_check
      _
    $region75: #{transformer_mintomics.1} parent=1 // pred_check_branch
      %2029 = sbr.rel (0) target = $region77
    $region76: #{transformer_mintomics.1} parent=1 // pred_region
      _
    $region77: #{transformer_mintomics.1} parent=1 // pred_fallthru
      _
    // Predicated region
    $region78: #{transformer_mintomics.1} parent=1 // pred_check
      _
    $region79: #{transformer_mintomics.1} parent=1 // pred_check_branch
      %2031 = sbr.rel (0) target = $region81
    $region80: #{transformer_mintomics.1} parent=1 // pred_region
      %2033 = vsyncadd [#allocation7], 0
      %s2034 = sshll.u32 [#allocation6], 4
      %s2035 = int_to_ptr.vmem [resolvable:$true] %s2034
      %s2036 = sshll.u32 %s7, 4
      %s2037 = int_to_ptr.hbm [resolvable:$true] %s2036
      %2042 = dma.vmem_to_hbm [thread:$0]  %s2035, 256, %s2037, [#allocation7], 128, 128, 8
    $region81: #{transformer_mintomics.1} parent=1 // pred_fallthru
      _
    // Predicated region
    $region82: #{transformer_mintomics.1} parent=1 // pred_check
      _
    $region83: #{transformer_mintomics.1} parent=1 // pred_check_branch
      %2044 = sbr.rel (0) target = $region85
    $region84: #{transformer_mintomics.1} parent=1 // pred_region
      _
    $region85: #{transformer_mintomics.1} parent=1 // pred_fallthru
      _
    // Predicated region
    $region86: #{transformer_mintomics.1} parent=1 // pred_check
      _
    $region87: #{transformer_mintomics.1} parent=1 // pred_check_branch
      %2046 = sbr.rel (0) target = $region89
    $region88: #{transformer_mintomics.1} parent=1 // pred_region
      %2048 = dma.done [#allocation7], 256
    $region89: #{transformer_mintomics.1} parent=1 // pred_fallthru
      _
    %2049 = vsyncpa [#allocation7], 1
  %2050 = vsyncmov [#allocation5]
  %s2051 = vpop.sfrf %2050
  %p2052 = scmp.eq.s32.totalorder %s2051, 0
  %p2053 = pneg %p2052
  %2055 = shalt.err (%p2053)
  %s2056 = scalar_lea.sflag [#allocation5], 1
  %2057 = vsyncmov %s2056
  %s2058 = vpop.sfrf %2057
  %p2059 = scmp.eq.s32.totalorder %s2058, 0
  %p2060 = pneg %p2059
  %2062 = shalt.err (%p2060)
  %s2063 = scalar_lea.sflag [#allocation5], 2
  %2064 = vsyncmov %s2063
  %s2065 = vpop.sfrf %2064
  %p2066 = scmp.eq.s32.totalorder %s2065, 0
  %p2067 = pneg %p2066
  %2069 = shalt.err (%p2067)

</llo_original>
